<compile_context>
chip_gen: v7x
topology: tpu7x:2x2x1
jax: 0.10.0
libtpu: 0.0.40
codegen_flags: <defaults>
</compile_context>

<pallas_src>
import functools
import math

import jax
import jax.numpy as jnp
from jax.experimental import pallas as pl
from jax.experimental.pallas import tpu as pltpu

HP = 128  # lane-padded width used for hidden / intermediate / latent-params dims


# ------------------------------ fused kernel -------------------------------- #

def _encoder_kernel(emb_ref, bias_ref, gvec_ref, wqkv_ref, wao_ref, wi_ref, wo_ref,
                    lvec_ref, pw_ref, hw_ref,            # inputs
                    pooled_ref, latent_ref,              # outputs
                    h_ref,                               # VMEM scratch (resident hidden)
                    *, B, S, H, nh, dh, ln_eps, head_eps):
    lane = jax.lax.broadcasted_iota(jnp.int32, (1, HP), 1)
    fmask = (lane < H).astype(jnp.float32)               # 1 on real features, 0 on pad

    def layer_norm(x, gamma, beta, eps):
        # Masked stats: padded lanes of x are exactly zero by construction, so the sum
        # is over real features; the mask keeps (x - mu) from polluting the variance.
        mu = jnp.sum(x, axis=-1, keepdims=True) * (1.0 / H)
        xc = (x - mu) * fmask
        var = jnp.sum(xc * xc, axis=-1, keepdims=True) * (1.0 / H)
        return xc * jax.lax.rsqrt(var + eps) * gamma + beta   # padded gamma/beta are 0

    gvec = gvec_ref[...]                                  # [8, HP] global small params
    l = pl.program_id(0)

    # ---- embeddings layernorm, only on the first grid step ----
    @pl.when(l == 0)
    def _():
        h_ref[...] = layer_norm(emb_ref[...], gvec[3:4, :], gvec[4:5, :], ln_eps)

    # ---- one encoder layer (batch fused: all M = B*S rows at once) ----
    x = h_ref[...]                                        # [M, HP]
    lvec = lvec_ref[0]                                    # [8, HP]  per-layer vectors
    wqkv = wqkv_ref[0]                                    # [HP, HP] bf16 (q|k|v|pad cols)
    wao = wao_ref[0]                                      # [H, HP]  bf16
    bias = bias_ref[...]                                  # [M, M] block-diag score bias

    # Fused QKV projection, lane-dense 128-wide result (scale already folded into q).
    qkv = jnp.dot(x.astype(wqkv.dtype), wqkv,
                  preferred_element_type=jnp.float32) + lvec[7:8, :]     # [M, HP]

    # Per-head attention over the whole fused batch; block-diagonal bias prevents
    # cross-example attention.  nh is tiny & static here.
    # TODO(synk): for nh=12 switch to a per-layer heads-on-sublane relayout + fori_loop.
    ctx_parts = []
    for n in range(nh):
        qn = qkv[:, n * dh:(n + 1) * dh]                  # [M, dh]
        kn = qkv[:, H + n * dh:H + (n + 1) * dh]
        vn = qkv[:, 2 * H + n * dh:2 * H + (n + 1) * dh]
        s = jax.lax.dot_general(qn, kn, (((1,), (1,)), ((), ())),
                                preferred_element_type=jnp.float32)      # [M, M]
        s = s + bias
        s = s - jnp.max(s, axis=-1, keepdims=True)
        p = jnp.exp(s)
        p = p / jnp.sum(p, axis=-1, keepdims=True)        # exact softmax (torch parity)
        ctx_parts.append(jnp.dot(p, vn, preferred_element_type=jnp.float32))  # [M, dh]
    ctx = jnp.concatenate(ctx_parts, axis=-1)             # [M, H], heads on lanes
    # Single attention-output matmul for all heads and all batch rows.
    attn = jnp.dot(ctx.astype(wao.dtype), wao,
                   preferred_element_type=jnp.float32) + lvec[0:1, :]    # [M, HP]

    h1 = layer_norm(x + attn, lvec[1:2, :], lvec[2:3, :], ln_eps)

    wi = wi_ref[0]                                        # [HP, HP] bf16
    wo = wo_ref[0]                                        # [HP, HP] bf16
    inter = jnp.dot(h1.astype(wi.dtype), wi,
                    preferred_element_type=jnp.float32) + lvec[3:4, :]
    inter = 0.5 * inter * (1.0 + jax.lax.erf(inter * (1.0 / math.sqrt(2.0))))  # exact gelu
    ffn = jnp.dot(inter.astype(wo.dtype), wo,
                  preferred_element_type=jnp.float32) + lvec[4:5, :]
    h2 = layer_norm(h1 + ffn, lvec[5:6, :], lvec[6:7, :], ln_eps)
    h_ref[...] = h2                                       # carry to next layer

    # ---- pooler + head layernorm + latent linear, only on the last step ----
    # pw/hw live in pl.ANY; DMA them into a scoped VMEM buffer only now, so they never
    # occupy (double-buffered) VMEM during the encoder layers.
    @pl.when(l == pl.num_programs(0) - 1)
    def _():
        def epilogue(wbuf):
            pltpu.sync_copy(pw_ref, wbuf.at[0])
            pltpu.sync_copy(hw_ref, wbuf.at[1])
            pw = wbuf[0]                                  # [HP, HP] bf16
            hw = wbuf[1]                                  # [HP, HP] bf16
            # Gather the [CLS] rows of every example into one [B, HP] tile.
            cls = jnp.concatenate([h2[b * S:b * S + 1, :] for b in range(B)], axis=0)
            pooled = jnp.tanh(
                jnp.dot(cls.astype(pw.dtype), pw, preferred_element_type=jnp.float32)
                + gvec[0:1, :])
            pooled = layer_norm(pooled, gvec[1:2, :], gvec[2:3, :], head_eps)
            pooled_ref[...] = pooled
            latent_ref[...] = jnp.dot(pooled.astype(hw.dtype), hw,
                                      preferred_element_type=jnp.float32)

        pl.run_scoped(epilogue, pltpu.VMEM((2, HP, HP), jnp.bfloat16))


# --------------------------- model / parameters ----------------------------- #

class Config:
    vocab_size = 100
    hidden_size = 32
    num_hidden_layers = 2
    num_attention_heads = 4
    intermediate_size = 64
    max_position_embeddings = 64
    type_vocab_size = 2
    layer_norm_eps = 1e-12   # BERT internal layernorms
    latent_size = 16


def init_params(cfg, key):
    """Synthetic parameters in the logical (unpadded) [in, out] layout."""
    keys = iter(jax.random.split(key, 160))

    def nrm(shape, scale=0.02):
        return (scale * jax.random.normal(next(keys), shape)).astype(jnp.float32)

    H, I = cfg.hidden_size, cfg.intermediate_size
    p = {
        "word_emb": nrm((cfg.vocab_size, H)),
        "pos_emb": nrm((cfg.max_position_embeddings, H)),
        "type_emb": nrm((cfg.type_vocab_size, H)),
        "emb_ln_g": 1.0 + nrm((H,)),
        "emb_ln_b": nrm((H,)),
        "layers": [],
        "pooler_w": nrm((H, H)),
        "pooler_b": nrm((H,)),
        # module-level head: nn.LayerNorm(hidden) + nn.Linear(hidden, 2*latent, bias=False)
        "head_ln_g": 1.0 + nrm((H,)),
        "head_ln_b": nrm((H,)),
        "head_lin_w": nrm((H, 2 * cfg.latent_size)),
    }
    for _ in range(cfg.num_hidden_layers):
        p["layers"].append({
            "q_w": nrm((H, H)), "q_b": nrm((H,)),
            "k_w": nrm((H, H)), "k_b": nrm((H,)),
            "v_w": nrm((H, H)), "v_b": nrm((H,)),
            "ao_w": nrm((H, H)), "ao_b": nrm((H,)),
            "ao_ln_g": 1.0 + nrm((H,)), "ao_ln_b": nrm((H,)),
            "i_w": nrm((H, I)), "i_b": nrm((I,)),
            "o_w": nrm((I, H)), "o_b": nrm((H,)),
            "o_ln_g": 1.0 + nrm((H,)), "o_ln_b": nrm((H,)),
        })
    return p


def pack_params(params, cfg):
    """Pad to 128 lanes, fuse QKV (scale folded into q), stack per-layer weights along a
    leading L axis, and cast the big matrices to bf16 (MXU operands, halves weight DMA)."""
    H, I = cfg.hidden_size, cfg.intermediate_size
    dh = H // cfg.num_attention_heads
    scale = 1.0 / math.sqrt(dh)
    assert H <= HP and 3 * H <= HP and I <= HP and 2 * cfg.latent_size <= HP

    def padc(x, cols=HP):  # pad last dim with zeros
        return jnp.pad(x, [(0, 0)] * (x.ndim - 1) + [(0, cols - x.shape[-1])])

    def pad2(x, rows, cols):
        return jnp.pad(x, ((0, rows - x.shape[0]), (0, cols - x.shape[1])))

    wqkv, wao, wi, wo, lvec = [], [], [], [], []
    for lp in params["layers"]:
        # Fold the attention scale into q_w / q_b; pad the fused QKV output dim to 128.
        qkv_w = jnp.concatenate([lp["q_w"] * scale, lp["k_w"], lp["v_w"]], axis=1)  # [H,3H]
        qkv_b = jnp.concatenate([lp["q_b"] * scale, lp["k_b"], lp["v_b"]])          # [3H]
        wqkv.append(pad2(qkv_w, HP, HP))
        wao.append(pad2(lp["ao_w"], H, HP))
        wi.append(pad2(lp["i_w"], HP, HP))
        wo.append(pad2(lp["o_w"], HP, HP))
        rows = [lp["ao_b"], lp["ao_ln_g"], lp["ao_ln_b"], lp["i_b"], lp["o_b"],
                lp["o_ln_g"], lp["o_ln_b"], qkv_b]
        lvec.append(jnp.stack([padc(r) for r in rows], axis=0))

    gvec_rows = [params["pooler_b"], params["head_ln_g"], params["head_ln_b"],
                 params["emb_ln_g"], params["emb_ln_b"],
                 jnp.zeros((H,), jnp.float32), jnp.zeros((H,), jnp.float32),
                 jnp.zeros((H,), jnp.float32)]

    return {
        "word_emb": padc(params["word_emb"]),
        "pos_emb": padc(params["pos_emb"]),
        "type_emb": padc(params["type_emb"]),
        "gvec": jnp.stack([padc(r) for r in gvec_rows], axis=0).astype(jnp.float32),
        "wqkv": jnp.stack(wqkv, axis=0).astype(jnp.bfloat16),   # [L, HP, HP]
        "wao": jnp.stack(wao, axis=0).astype(jnp.bfloat16),     # [L, H, HP]
        "wi": jnp.stack(wi, axis=0).astype(jnp.bfloat16),       # [L, HP, HP]
        "wo": jnp.stack(wo, axis=0).astype(jnp.bfloat16),       # [L, HP, HP]
        "lvec": jnp.stack(lvec, axis=0).astype(jnp.float32),    # [L, 8, HP]
        "pooler_w": pad2(params["pooler_w"], HP, HP).astype(jnp.bfloat16),
        "head_w": pad2(params["head_lin_w"], HP, HP).astype(jnp.bfloat16),
    }


def bert_for_latent_connector_forward(packed, input_ids, attention_mask=None,
                                      token_type_ids=None, *, cfg):
    """Returns (pooled_output [B,H], latent_params [B, 2*latent_size])."""
    B, S = input_ids.shape
    H = cfg.hidden_size
    nh = cfg.num_attention_heads
    dh = H // nh
    L = cfg.num_hidden_layers
    M = B * S
    assert H % nh == 0

    if attention_mask is None:
        attention_mask = jnp.ones((B, S), jnp.float32)
    if token_type_ids is None:
        token_type_ids = jnp.zeros((B, S), jnp.int32)

    # Block-diagonal additive score bias for the batch-fused [M, M] score matrix:
    # within-example entries carry BERT's (1 - mask) * -10000 key bias, cross-example
    # entries get -1e9 so fusing the batch cannot mix examples.
    mask_flat = attention_mask.astype(jnp.float32).reshape(M)
    batch_id = jnp.arange(M, dtype=jnp.int32) // S
    same_example = batch_id[:, None] == batch_id[None, :]
    score_bias = jnp.where(same_example,
                           (1.0 - mask_flat)[None, :] * -10000.0,
                           -1e9).astype(jnp.float32)                      # [M, M]

    # Embedding gathers are glue (scatter/gather has no tidy BlockSpec form at this size).
    emb = (jnp.take(packed["word_emb"], input_ids, axis=0)
           + packed["pos_emb"][None, :S, :]
           + jnp.take(packed["type_emb"], token_type_ids, axis=0)).reshape(M, HP)

    kernel = functools.partial(
        _encoder_kernel, B=B, S=S, H=H, nh=nh, dh=dh,
        ln_eps=cfg.layer_norm_eps, head_eps=1e-5)

    pooled_pad, latent_pad = pl.pallas_call(
        kernel,
        out_shape=(jax.ShapeDtypeStruct((B, HP), jnp.float32),
                   jax.ShapeDtypeStruct((B, HP), jnp.float32)),
        grid=(L,),
        in_specs=[
            pl.BlockSpec((M, HP), lambda l: (0, 0)),            # embeddings (layer 0 only)
            pl.BlockSpec((M, M), lambda l: (0, 0)),             # block-diag score bias
            pl.BlockSpec((8, HP), lambda l: (0, 0)),            # global vectors
            pl.BlockSpec((1, HP, HP), lambda l: (l, 0, 0)),     # fused QKV weight (stream)
            pl.BlockSpec((1, H, HP), lambda l: (l, 0, 0)),      # attn output weight
            pl.BlockSpec((1, HP, HP), lambda l: (l, 0, 0)),     # FFN in weight
            pl.BlockSpec((1, HP, HP), lambda l: (l, 0, 0)),     # FFN out weight
            pl.BlockSpec((1, 8, HP), lambda l: (l, 0, 0)),      # per-layer vectors
            pl.BlockSpec(memory_space=pl.ANY),                  # pooler weight (epilogue DMA)
            pl.BlockSpec(memory_space=pl.ANY),                  # head linear weight
        ],
        out_specs=(pl.BlockSpec((B, HP), lambda l: (0, 0)),
                   pl.BlockSpec((B, HP), lambda l: (0, 0))),
        scratch_shapes=[pltpu.VMEM((M, HP), jnp.float32)],       # resident hidden state
        compiler_params=pltpu.CompilerParams(
            dimension_semantics=("arbitrary",),
            vmem_limit_bytes=32 * 1024 * 1024),
        # TODO(synk): on v7x add a leading "parallel" batch axis (2nd TensorCore) once
        # B*S is large enough that splitting beats the duplicated weight streaming.
    )(emb, score_bias, packed["gvec"], packed["wqkv"], packed["wao"],
      packed["wi"], packed["wo"], packed["lvec"], packed["pooler_w"], packed["head_w"])

    # Drop the lane padding outside the kernel (cheap XLA slice).
    return pooled_pad[:, :H], latent_pad[:, :2 * cfg.latent_size]
    # TODO(synk): encode_to_latent's reparameterization sampling (randn_like) is not
    # part of forward() and is left to the caller.


# ----------------------- pure-JAX reference (for checking) ------------------- #

def reference_forward(packed, input_ids, attention_mask, token_type_ids, *, cfg):
    """Plain-JAX BERT forward using the same packed weights (mirrors the kernel's
    bf16 casts of MXU operands so it matches to float32 round-off)."""
    H, I, Lt = cfg.hidden_size, cfg.intermediate_size, cfg.latent_size
    nh = cfg.num_attention_heads
    dh = H // nh
    B, S = input_ids.shape
    f32 = jnp.float32

    def bf(x):  # mirror the kernel's bf16 cast of matmul activations
        return x.astype(jnp.bfloat16).astype(f32)

    def ln(x, g, b, eps):
        mu = jnp.mean(x, axis=-1, keepdims=True)
        var = jnp.mean((x - mu) ** 2, axis=-1, keepdims=True)
        return (x - mu) * jax.lax.rsqrt(var + eps) * g + b

    gvec = packed["gvec"]
    x = (jnp.take(packed["word_emb"], input_ids, axis=0)[..., :H]
         + packed["pos_emb"][None, :S, :H]
         + jnp.take(packed["type_emb"], token_type_ids, axis=0)[..., :H])
    x = ln(x, gvec[3, :H], gvec[4, :H], cfg.layer_norm_eps)
    maskb = (1.0 - attention_mask.astype(f32)) * -10000.0          # [B, S]

    for l in range(cfg.num_hidden_layers):
        wqkv = packed["wqkv"][l].astype(f32)[:H, :3 * H]           # scale already folded
        bqkv = packed["lvec"][l, 7, :3 * H]
        qkv = jnp.einsum("bsh,hf->bsf", bf(x), wqkv) + bqkv
        q = qkv[..., 0:H].reshape(B, S, nh, dh)
        k = qkv[..., H:2 * H].reshape(B, S, nh, dh)
        v = qkv[..., 2 * H:3 * H].reshape(B, S, nh, dh)
        s = jnp.einsum("bqnd,bknd->bnqk", q, k) + maskb[:, None, None, :]
        p = jax.nn.softmax(s, axis=-1)
        ctx = jnp.einsum("bnqk,bknd->bqnd", p, v).reshape(B, S, H)
        wao = packed["wao"][l].astype(f32)[:, :H]
        attn = jnp.einsum("bsh,hf->bsf", bf(ctx), wao) + packed["lvec"][l, 0, :H]
        h1 = ln(x + attn, packed["lvec"][l, 1, :H], packed["lvec"][l, 2, :H],
                cfg.layer_norm_eps)
        wi = packed["wi"][l].astype(f32)[:H, :I]
        inter = jnp.einsum("bsh,hf->bsf", bf(h1), wi) + packed["lvec"][l, 3, :I]
        inter = 0.5 * inter * (1.0 + jax.lax.erf(inter * (1.0 / math.sqrt(2.0))))
        wo = packed["wo"][l].astype(f32)[:I, :H]
        ffn = jnp.einsum("bsi,ih->bsh", bf(inter), wo) + packed["lvec"][l, 4, :H]
        x = ln(h1 + ffn, packed["lvec"][l, 5, :H], packed["lvec"][l, 6, :H],
               cfg.layer_norm_eps)

    pw = packed["pooler_w"].astype(f32)[:H, :H]
    pooled = jnp.tanh(jnp.einsum("bh,hf->bf", bf(x[:, 0, :]), pw) + gvec[0, :H])
    pooled = ln(pooled, gvec[1, :H], gvec[2, :H], 1e-5)
    hw = packed["head_w"].astype(f32)[:H, :2 * Lt]
    latent = jnp.einsum("bh,hf->bf", bf(pooled), hw)
    return pooled, latent


if __name__ == "__main__":
    cfg = Config()
    key = jax.random.PRNGKey(0)
    pkey, ikey = jax.random.split(key)
    params = init_params(cfg, pkey)
    packed = pack_params(params, cfg)

    B, S = 2, 8
    input_ids = jax.random.randint(ikey, (B, S), 0, cfg.vocab_size, dtype=jnp.int32)
    # Partially masked second example + mixed token types to exercise the mask / type paths.
    attention_mask = jnp.ones((B, S), jnp.float32).at[1, S - 3:].set(0.0)
    token_type_ids = jnp.zeros((B, S), jnp.int32).at[:, S // 2:].set(1)

    fwd = jax.jit(functools.partial(bert_for_latent_connector_forward, cfg=cfg))
    pooled, latent = fwd(packed, input_ids, attention_mask, token_type_ids)
    jax.block_until_ready((pooled, latent))

    assert pooled.shape == (B, cfg.hidden_size)
    assert latent.shape == (B, 2 * cfg.latent_size)
    assert bool(jnp.all(jnp.isfinite(pooled))) and bool(jnp.all(jnp.isfinite(latent)))

    ref_pooled, ref_latent = jax.jit(functools.partial(reference_forward, cfg=cfg))(
        packed, input_ids, attention_mask, token_type_ids)
    jax.block_until_ready((ref_pooled, ref_latent))

    assert jnp.allclose(pooled, ref_pooled, atol=3e-2, rtol=3e-2), (
        "pooled mismatch, max abs diff = %f" % float(jnp.max(jnp.abs(pooled - ref_pooled))))
    assert jnp.allclose(latent, ref_latent, atol=3e-2, rtol=3e-2), (
        "latent mismatch, max abs diff = %f" % float(jnp.max(jnp.abs(latent - ref_latent))))

    print("KERNEL_OK")
</pallas_src>

<mosaic_0001>
module attributes {stable_mosaic.version = 11 : i64} {
  func.func @_encoder_kernel(%arg0: i32, %arg1: memref<16x128xf32, #tpu.memory_space<vmem>>, %arg2: memref<16x16xf32, #tpu.memory_space<vmem>>, %arg3: memref<8x128xf32, #tpu.memory_space<vmem>>, %arg4: memref<1x128x128xbf16, #tpu.memory_space<vmem>>, %arg5: memref<1x32x128xbf16, #tpu.memory_space<vmem>>, %arg6: memref<1x128x128xbf16, #tpu.memory_space<vmem>>, %arg7: memref<1x128x128xbf16, #tpu.memory_space<vmem>>, %arg8: memref<1x8x128xf32, #tpu.memory_space<vmem>>, %arg9: memref<128x128xbf16, #tpu.memory_space<any>>, %arg10: memref<128x128xbf16, #tpu.memory_space<any>>, %arg11: memref<2x128xf32, #tpu.memory_space<vmem>>, %arg12: memref<2x128xf32, #tpu.memory_space<vmem>>, %arg13: memref<16x128xf32, #tpu.memory_space<vmem>>) attributes {dimension_semantics = [#tpu.dimension_semantics<arbitrary>], iteration_bounds = array<i64: 2>, scalar_prefetch = 0 : i64, scratch_operands = 1 : i64, tpu.core_type = #tpu.core_type<tc>, window_params = [{pipeline_mode = #tpu.pipeline_mode<synchronous>, transform_indices = @transform_0, window_bounds = array<i64: 16, 128>}, {pipeline_mode = #tpu.pipeline_mode<synchronous>, transform_indices = @transform_1, window_bounds = array<i64: 16, 16>}, {pipeline_mode = #tpu.pipeline_mode<synchronous>, transform_indices = @transform_2, window_bounds = array<i64: 8, 128>}, {transform_indices = @transform_3, window_bounds = array<i64: 1, 128, 128>}, {transform_indices = @transform_4, window_bounds = array<i64: 1, 32, 128>}, {transform_indices = @transform_5, window_bounds = array<i64: 1, 128, 128>}, {transform_indices = @transform_6, window_bounds = array<i64: 1, 128, 128>}, {transform_indices = @transform_7, window_bounds = array<i64: 1, 8, 128>}, {}, {}, {pipeline_mode = #tpu.pipeline_mode<synchronous>, transform_indices = @transform_10, window_bounds = array<i64: 2, 128>}, {pipeline_mode = #tpu.pipeline_mode<synchronous>, transform_indices = @transform_11, window_bounds = array<i64: 2, 128>}]} {
    %0 = tpu.iota {dimensions = array<i32: 1>} : vector<1x128xi32>
    %c32_i32 = arith.constant 32 : i32
    %1 = vector.broadcast %c32_i32 : i32 to vector<1x128xi32>
    %2 = arith.cmpi slt, %0, %1 : vector<1x128xi32>
    %3 = arith.extui %2 : vector<1x128xi1> to vector<1x128xi32>
    %4 = arith.sitofp %3 : vector<1x128xi32> to vector<1x128xf32>
    %c0 = arith.constant 0 : index
    %c0_0 = arith.constant 0 : index
    %5 = vector.load %arg3[%c0, %c0_0] : memref<8x128xf32, #tpu.memory_space<vmem>>, vector<8x128xf32>
    %c0_i32 = arith.constant 0 : i32
    %6 = arith.cmpi eq, %arg0, %c0_i32 : i32
    %7 = arith.extui %6 : i1 to i32
    %c0_i32_1 = arith.constant 0 : i32
    %8 = arith.cmpi ne, %7, %c0_i32_1 : i32
    scf.if %8 {
      %c0_56 = arith.constant 0 : index
      %c0_57 = arith.constant 0 : index
      %164 = vector.load %arg1[%c0_56, %c0_57] : memref<16x128xf32, #tpu.memory_space<vmem>>, vector<16x128xf32>
      %165 = vector.extract_strided_slice %5 {offsets = [3, 0], sizes = [1, 128], strides = [1, 1]} : vector<8x128xf32> to vector<1x128xf32>
      %166 = vector.extract_strided_slice %5 {offsets = [4, 0], sizes = [1, 128], strides = [1, 1]} : vector<8x128xf32> to vector<1x128xf32>
      %cst_58 = arith.constant dense<0.000000e+00> : vector<16xf32>
      %167 = vector.multi_reduction <add>, %164, %cst_58 [1] : vector<16x128xf32> to vector<16xf32>
      %168 = vector.shape_cast %167 : vector<16xf32> to vector<16x1xf32>
      %cst_59 = arith.constant 3.125000e-02 : f32
      %169 = vector.broadcast %cst_59 : f32 to vector<16x1xf32>
      %170 = arith.mulf %168, %169 : vector<16x1xf32>
      %171 = vector.broadcast %170 : vector<16x1xf32> to vector<16x128xf32>
      %172 = arith.subf %164, %171 : vector<16x128xf32>
      %173 = vector.broadcast %4 : vector<1x128xf32> to vector<16x128xf32>
      %174 = arith.mulf %172, %173 : vector<16x128xf32>
      %175 = arith.mulf %174, %174 : vector<16x128xf32>
      %cst_60 = arith.constant dense<0.000000e+00> : vector<16xf32>
      %176 = vector.multi_reduction <add>, %175, %cst_60 [1] : vector<16x128xf32> to vector<16xf32>
      %177 = vector.shape_cast %176 : vector<16xf32> to vector<16x1xf32>
      %cst_61 = arith.constant 3.125000e-02 : f32
      %178 = vector.broadcast %cst_61 : f32 to vector<16x1xf32>
      %179 = arith.mulf %177, %178 : vector<16x1xf32>
      %cst_62 = arith.constant 9.99999996E-13 : f32
      %180 = vector.broadcast %cst_62 : f32 to vector<16x1xf32>
      %181 = arith.addf %179, %180 : vector<16x1xf32>
      %182 = math.rsqrt %181 : vector<16x1xf32>
      %183 = vector.broadcast %182 : vector<16x1xf32> to vector<16x128xf32>
      %184 = arith.mulf %174, %183 : vector<16x128xf32>
      %185 = vector.broadcast %165 : vector<1x128xf32> to vector<16x128xf32>
      %186 = arith.mulf %184, %185 : vector<16x128xf32>
      %187 = vector.broadcast %166 : vector<1x128xf32> to vector<16x128xf32>
      %188 = arith.addf %186, %187 : vector<16x128xf32>
      %c0_63 = arith.constant 0 : index
      %c0_64 = arith.constant 0 : index
      %189 = vector.load %arg13[%c0_63, %c0_64] : memref<16x128xf32, #tpu.memory_space<vmem>>, vector<16x128xf32>
      tpu.vector_store %arg13[%c0_63, %c0_64], %188 {strides = array<i32>} : memref<16x128xf32, #tpu.memory_space<vmem>>, vector<16x128xf32>,
    } else {
    }
    %c0_2 = arith.constant 0 : index
    %c0_3 = arith.constant 0 : index
    %9 = vector.load %arg13[%c0_2, %c0_3] : memref<16x128xf32, #tpu.memory_space<vmem>>, vector<16x128xf32>
    %c0_4 = arith.constant 0 : index
    %c0_5 = arith.constant 0 : index
    %c0_6 = arith.constant 0 : index
    %10 = vector.load %arg8[%c0_4, %c0_5, %c0_6] : memref<1x8x128xf32, #tpu.memory_space<vmem>>, vector<1x8x128xf32>
    %11 = vector.shape_cast %10 : vector<1x8x128xf32> to vector<8x128xf32>
    %c0_7 = arith.constant 0 : index
    %c0_8 = arith.constant 0 : index
    %c0_9 = arith.constant 0 : index
    %12 = vector.load %arg4[%c0_7, %c0_8, %c0_9] : memref<1x128x128xbf16, #tpu.memory_space<vmem>>, vector<1x128x128xbf16>
    %13 = vector.shape_cast %12 : vector<1x128x128xbf16> to vector<128x128xbf16>
    %c0_10 = arith.constant 0 : index
    %c0_11 = arith.constant 0 : index
    %c0_12 = arith.constant 0 : index
    %14 = vector.load %arg5[%c0_10, %c0_11, %c0_12] : memref<1x32x128xbf16, #tpu.memory_space<vmem>>, vector<1x32x128xbf16>
    %15 = vector.shape_cast %14 : vector<1x32x128xbf16> to vector<32x128xbf16>
    %c0_13 = arith.constant 0 : index
    %c0_14 = arith.constant 0 : index
    %16 = vector.load %arg2[%c0_13, %c0_14] : memref<16x16xf32, #tpu.memory_space<vmem>>, vector<16x16xf32>
    %17 = arith.truncf %9 : vector<16x128xf32> to vector<16x128xbf16>
    %cst = arith.constant dense<0.000000e+00> : vector<16x128xf32>
    %18 = tpu.matmul %17, %13, %cst {dimension_numbers = #tpu.dot_dimension_numbers<[1], [0], [0], [1], [0, 0, 1, 1], [], []>} : vector<16x128xbf16>, vector<128x128xbf16>, vector<16x128xf32> -> vector<16x128xf32>
    %19 = vector.extract_strided_slice %11 {offsets = [7, 0], sizes = [1, 128], strides = [1, 1]} : vector<8x128xf32> to vector<1x128xf32>
    %20 = vector.broadcast %19 : vector<1x128xf32> to vector<16x128xf32>
    %21 = arith.addf %18, %20 : vector<16x128xf32>
    %22 = vector.extract_strided_slice %21 {offsets = [0, 0], sizes = [16, 8], strides = [1, 1]} : vector<16x128xf32> to vector<16x8xf32>
    %23 = vector.extract_strided_slice %21 {offsets = [0, 32], sizes = [16, 8], strides = [1, 1]} : vector<16x128xf32> to vector<16x8xf32>
    %24 = vector.extract_strided_slice %21 {offsets = [0, 64], sizes = [16, 8], strides = [1, 1]} : vector<16x128xf32> to vector<16x8xf32>
    %cst_15 = arith.constant dense<0.000000e+00> : vector<16x16xf32>
    %25 = tpu.matmul %22, %23, %cst_15 {dimension_numbers = #tpu.dot_dimension_numbers<[1], [1], [0], [0], [0, 0, 1, 0], [], []>} : vector<16x8xf32>, vector<16x8xf32>, vector<16x16xf32> -> vector<16x16xf32>
    %26 = arith.addf %25, %16 : vector<16x16xf32>
    %cst_16 = arith.constant dense<0xFF800000> : vector<16xf32>
    %27 = vector.multi_reduction <maximumf>, %26, %cst_16 [1] : vector<16x16xf32> to vector<16xf32>
    %28 = vector.shape_cast %27 : vector<16xf32> to vector<16x1xf32>
    %29 = vector.broadcast %28 : vector<16x1xf32> to vector<16x16xf32>
    %30 = arith.subf %26, %29 : vector<16x16xf32>
    %31 = math.exp %30 : vector<16x16xf32>
    %cst_17 = arith.constant dense<0.000000e+00> : vector<16xf32>
    %32 = vector.multi_reduction <add>, %31, %cst_17 [1] : vector<16x16xf32> to vector<16xf32>
    %33 = vector.shape_cast %32 : vector<16xf32> to vector<16x1xf32>
    %34 = vector.broadcast %33 : vector<16x1xf32> to vector<16x16xf32>
    %35 = arith.divf %31, %34 : vector<16x16xf32>
    %cst_18 = arith.constant dense<0.000000e+00> : vector<16x8xf32>
    %36 = tpu.matmul %35, %24, %cst_18 {dimension_numbers = #tpu.dot_dimension_numbers<[1], [0], [0], [1], [0, 0, 1, 1], [], []>} : vector<16x16xf32>, vector<16x8xf32>, vector<16x8xf32> -> vector<16x8xf32>
    %37 = vector.extract_strided_slice %21 {offsets = [0, 8], sizes = [16, 8], strides = [1, 1]} : vector<16x128xf32> to vector<16x8xf32>
    %38 = vector.extract_strided_slice %21 {offsets = [0, 40], sizes = [16, 8], strides = [1, 1]} : vector<16x128xf32> to vector<16x8xf32>
    %39 = vector.extract_strided_slice %21 {offsets = [0, 72], sizes = [16, 8], strides = [1, 1]} : vector<16x128xf32> to vector<16x8xf32>
    %cst_19 = arith.constant dense<0.000000e+00> : vector<16x16xf32>
    %40 = tpu.matmul %37, %38, %cst_19 {dimension_numbers = #tpu.dot_dimension_numbers<[1], [1], [0], [0], [0, 0, 1, 0], [], []>} : vector<16x8xf32>, vector<16x8xf32>, vector<16x16xf32> -> vector<16x16xf32>
    %41 = arith.addf %40, %16 : vector<16x16xf32>
    %cst_20 = arith.constant dense<0xFF800000> : vector<16xf32>
    %42 = vector.multi_reduction <maximumf>, %41, %cst_20 [1] : vector<16x16xf32> to vector<16xf32>
    %43 = vector.shape_cast %42 : vector<16xf32> to vector<16x1xf32>
    %44 = vector.broadcast %43 : vector<16x1xf32> to vector<16x16xf32>
    %45 = arith.subf %41, %44 : vector<16x16xf32>
    %46 = math.exp %45 : vector<16x16xf32>
    %cst_21 = arith.constant dense<0.000000e+00> : vector<16xf32>
    %47 = vector.multi_reduction <add>, %46, %cst_21 [1] : vector<16x16xf32> to vector<16xf32>
    %48 = vector.shape_cast %47 : vector<16xf32> to vector<16x1xf32>
    %49 = vector.broadcast %48 : vector<16x1xf32> to vector<16x16xf32>
    %50 = arith.divf %46, %49 : vector<16x16xf32>
    %cst_22 = arith.constant dense<0.000000e+00> : vector<16x8xf32>
    %51 = tpu.matmul %50, %39, %cst_22 {dimension_numbers = #tpu.dot_dimension_numbers<[1], [0], [0], [1], [0, 0, 1, 1], [], []>} : vector<16x16xf32>, vector<16x8xf32>, vector<16x8xf32> -> vector<16x8xf32>
    %52 = vector.extract_strided_slice %21 {offsets = [0, 16], sizes = [16, 8], strides = [1, 1]} : vector<16x128xf32> to vector<16x8xf32>
    %53 = vector.extract_strided_slice %21 {offsets = [0, 48], sizes = [16, 8], strides = [1, 1]} : vector<16x128xf32> to vector<16x8xf32>
    %54 = vector.extract_strided_slice %21 {offsets = [0, 80], sizes = [16, 8], strides = [1, 1]} : vector<16x128xf32> to vector<16x8xf32>
    %cst_23 = arith.constant dense<0.000000e+00> : vector<16x16xf32>
    %55 = tpu.matmul %52, %53, %cst_23 {dimension_numbers = #tpu.dot_dimension_numbers<[1], [1], [0], [0], [0, 0, 1, 0], [], []>} : vector<16x8xf32>, vector<16x8xf32>, vector<16x16xf32> -> vector<16x16xf32>
    %56 = arith.addf %55, %16 : vector<16x16xf32>
    %cst_24 = arith.constant dense<0xFF800000> : vector<16xf32>
    %57 = vector.multi_reduction <maximumf>, %56, %cst_24 [1] : vector<16x16xf32> to vector<16xf32>
    %58 = vector.shape_cast %57 : vector<16xf32> to vector<16x1xf32>
    %59 = vector.broadcast %58 : vector<16x1xf32> to vector<16x16xf32>
    %60 = arith.subf %56, %59 : vector<16x16xf32>
    %61 = math.exp %60 : vector<16x16xf32>
    %cst_25 = arith.constant dense<0.000000e+00> : vector<16xf32>
    %62 = vector.multi_reduction <add>, %61, %cst_25 [1] : vector<16x16xf32> to vector<16xf32>
    %63 = vector.shape_cast %62 : vector<16xf32> to vector<16x1xf32>
    %64 = vector.broadcast %63 : vector<16x1xf32> to vector<16x16xf32>
    %65 = arith.divf %61, %64 : vector<16x16xf32>
    %cst_26 = arith.constant dense<0.000000e+00> : vector<16x8xf32>
    %66 = tpu.matmul %65, %54, %cst_26 {dimension_numbers = #tpu.dot_dimension_numbers<[1], [0], [0], [1], [0, 0, 1, 1], [], []>} : vector<16x16xf32>, vector<16x8xf32>, vector<16x8xf32> -> vector<16x8xf32>
    %67 = vector.extract_strided_slice %21 {offsets = [0, 24], sizes = [16, 8], strides = [1, 1]} : vector<16x128xf32> to vector<16x8xf32>
    %68 = vector.extract_strided_slice %21 {offsets = [0, 56], sizes = [16, 8], strides = [1, 1]} : vector<16x128xf32> to vector<16x8xf32>
    %69 = vector.extract_strided_slice %21 {offsets = [0, 88], sizes = [16, 8], strides = [1, 1]} : vector<16x128xf32> to vector<16x8xf32>
    %cst_27 = arith.constant dense<0.000000e+00> : vector<16x16xf32>
    %70 = tpu.matmul %67, %68, %cst_27 {dimension_numbers = #tpu.dot_dimension_numbers<[1], [1], [0], [0], [0, 0, 1, 0], [], []>} : vector<16x8xf32>, vector<16x8xf32>, vector<16x16xf32> -> vector<16x16xf32>
    %71 = arith.addf %70, %16 : vector<16x16xf32>
    %cst_28 = arith.constant dense<0xFF800000> : vector<16xf32>
    %72 = vector.multi_reduction <maximumf>, %71, %cst_28 [1] : vector<16x16xf32> to vector<16xf32>
    %73 = vector.shape_cast %72 : vector<16xf32> to vector<16x1xf32>
    %74 = vector.broadcast %73 : vector<16x1xf32> to vector<16x16xf32>
    %75 = arith.subf %71, %74 : vector<16x16xf32>
    %76 = math.exp %75 : vector<16x16xf32>
    %cst_29 = arith.constant dense<0.000000e+00> : vector<16xf32>
    %77 = vector.multi_reduction <add>, %76, %cst_29 [1] : vector<16x16xf32> to vector<16xf32>
    %78 = vector.shape_cast %77 : vector<16xf32> to vector<16x1xf32>
    %79 = vector.broadcast %78 : vector<16x1xf32> to vector<16x16xf32>
    %80 = arith.divf %76, %79 : vector<16x16xf32>
    %cst_30 = arith.constant dense<0.000000e+00> : vector<16x8xf32>
    %81 = tpu.matmul %80, %69, %cst_30 {dimension_numbers = #tpu.dot_dimension_numbers<[1], [0], [0], [1], [0, 0, 1, 1], [], []>} : vector<16x16xf32>, vector<16x8xf32>, vector<16x8xf32> -> vector<16x8xf32>
    %82 = tpu.concatenate %36, %51, %66, %81 in 1 : vector<16x8xf32>, vector<16x8xf32>, vector<16x8xf32>, vector<16x8xf32> -> vector<16x32xf32>
    %83 = arith.truncf %82 : vector<16x32xf32> to vector<16x32xbf16>
    %cst_31 = arith.constant dense<0.000000e+00> : vector<16x128xf32>
    %84 = tpu.matmul %83, %15, %cst_31 {dimension_numbers = #tpu.dot_dimension_numbers<[1], [0], [0], [1], [0, 0, 1, 1], [], []>} : vector<16x32xbf16>, vector<32x128xbf16>, vector<16x128xf32> -> vector<16x128xf32>
    %85 = vector.extract_strided_slice %11 {offsets = [0, 0], sizes = [1, 128], strides = [1, 1]} : vector<8x128xf32> to vector<1x128xf32>
    %86 = vector.broadcast %85 : vector<1x128xf32> to vector<16x128xf32>
    %87 = arith.addf %84, %86 : vector<16x128xf32>
    %88 = arith.addf %9, %87 : vector<16x128xf32>
    %89 = vector.extract_strided_slice %11 {offsets = [1, 0], sizes = [1, 128], strides = [1, 1]} : vector<8x128xf32> to vector<1x128xf32>
    %90 = vector.extract_strided_slice %11 {offsets = [2, 0], sizes = [1, 128], strides = [1, 1]} : vector<8x128xf32> to vector<1x128xf32>
    %cst_32 = arith.constant dense<0.000000e+00> : vector<16xf32>
    %91 = vector.multi_reduction <add>, %88, %cst_32 [1] : vector<16x128xf32> to vector<16xf32>
    %92 = vector.shape_cast %91 : vector<16xf32> to vector<16x1xf32>
    %cst_33 = arith.constant 3.125000e-02 : f32
    %93 = vector.broadcast %cst_33 : f32 to vector<16x1xf32>
    %94 = arith.mulf %92, %93 : vector<16x1xf32>
    %95 = vector.broadcast %94 : vector<16x1xf32> to vector<16x128xf32>
    %96 = arith.subf %88, %95 : vector<16x128xf32>
    %97 = vector.broadcast %4 : vector<1x128xf32> to vector<16x128xf32>
    %98 = arith.mulf %96, %97 : vector<16x128xf32>
    %99 = arith.mulf %98, %98 : vector<16x128xf32>
    %cst_34 = arith.constant dense<0.000000e+00> : vector<16xf32>
    %100 = vector.multi_reduction <add>, %99, %cst_34 [1] : vector<16x128xf32> to vector<16xf32>
    %101 = vector.shape_cast %100 : vector<16xf32> to vector<16x1xf32>
    %cst_35 = arith.constant 3.125000e-02 : f32
    %102 = vector.broadcast %cst_35 : f32 to vector<16x1xf32>
    %103 = arith.mulf %101, %102 : vector<16x1xf32>
    %cst_36 = arith.constant 9.99999996E-13 : f32
    %104 = vector.broadcast %cst_36 : f32 to vector<16x1xf32>
    %105 = arith.addf %103, %104 : vector<16x1xf32>
    %106 = math.rsqrt %105 : vector<16x1xf32>
    %107 = vector.broadcast %106 : vector<16x1xf32> to vector<16x128xf32>
    %108 = arith.mulf %98, %107 : vector<16x128xf32>
    %109 = vector.broadcast %89 : vector<1x128xf32> to vector<16x128xf32>
    %110 = arith.mulf %108, %109 : vector<16x128xf32>
    %111 = vector.broadcast %90 : vector<1x128xf32> to vector<16x128xf32>
    %112 = arith.addf %110, %111 : vector<16x128xf32>
    %c0_37 = arith.constant 0 : index
    %c0_38 = arith.constant 0 : index
    %c0_39 = arith.constant 0 : index
    %113 = vector.load %arg6[%c0_37, %c0_38, %c0_39] : memref<1x128x128xbf16, #tpu.memory_space<vmem>>, vector<1x128x128xbf16>
    %114 = vector.shape_cast %113 : vector<1x128x128xbf16> to vector<128x128xbf16>
    %c0_40 = arith.constant 0 : index
    %c0_41 = arith.constant 0 : index
    %c0_42 = arith.constant 0 : index
    %115 = vector.load %arg7[%c0_40, %c0_41, %c0_42] : memref<1x128x128xbf16, #tpu.memory_space<vmem>>, vector<1x128x128xbf16>
    %116 = vector.shape_cast %115 : vector<1x128x128xbf16> to vector<128x128xbf16>
    %117 = arith.truncf %112 : vector<16x128xf32> to vector<16x128xbf16>
    %cst_43 = arith.constant dense<0.000000e+00> : vector<16x128xf32>
    %118 = tpu.matmul %117, %114, %cst_43 {dimension_numbers = #tpu.dot_dimension_numbers<[1], [0], [0], [1], [0, 0, 1, 1], [], []>} : vector<16x128xbf16>, vector<128x128xbf16>, vector<16x128xf32> -> vector<16x128xf32>
    %119 = vector.extract_strided_slice %11 {offsets = [3, 0], sizes = [1, 128], strides = [1, 1]} : vector<8x128xf32> to vector<1x128xf32>
    %120 = vector.broadcast %119 : vector<1x128xf32> to vector<16x128xf32>
    %121 = arith.addf %118, %120 : vector<16x128xf32>
    %cst_44 = arith.constant 5.000000e-01 : f32
    %122 = vector.broadcast %cst_44 : f32 to vector<16x128xf32>
    %123 = arith.mulf %122, %121 : vector<16x128xf32>
    %cst_45 = arith.constant 0.707106769 : f32
    %124 = vector.broadcast %cst_45 : f32 to vector<16x128xf32>
    %125 = arith.mulf %121, %124 : vector<16x128xf32>
    %126 = math.erf %125 : vector<16x128xf32>
    %cst_46 = arith.constant 1.000000e+00 : f32
    %127 = vector.broadcast %cst_46 : f32 to vector<16x128xf32>
    %128 = arith.addf %127, %126 : vector<16x128xf32>
    %129 = arith.mulf %123, %128 : vector<16x128xf32>
    %130 = arith.truncf %129 : vector<16x128xf32> to vector<16x128xbf16>
    %cst_47 = arith.constant dense<0.000000e+00> : vector<16x128xf32>
    %131 = tpu.matmul %130, %116, %cst_47 {dimension_numbers = #tpu.dot_dimension_numbers<[1], [0], [0], [1], [0, 0, 1, 1], [], []>} : vector<16x128xbf16>, vector<128x128xbf16>, vector<16x128xf32> -> vector<16x128xf32>
    %132 = vector.extract_strided_slice %11 {offsets = [4, 0], sizes = [1, 128], strides = [1, 1]} : vector<8x128xf32> to vector<1x128xf32>
    %133 = vector.broadcast %132 : vector<1x128xf32> to vector<16x128xf32>
    %134 = arith.addf %131, %133 : vector<16x128xf32>
    %135 = arith.addf %112, %134 : vector<16x128xf32>
    %136 = vector.extract_strided_slice %11 {offsets = [5, 0], sizes = [1, 128], strides = [1, 1]} : vector<8x128xf32> to vector<1x128xf32>
    %137 = vector.extract_strided_slice %11 {offsets = [6, 0], sizes = [1, 128], strides = [1, 1]} : vector<8x128xf32> to vector<1x128xf32>
    %cst_48 = arith.constant dense<0.000000e+00> : vector<16xf32>
    %138 = vector.multi_reduction <add>, %135, %cst_48 [1] : vector<16x128xf32> to vector<16xf32>
    %139 = vector.shape_cast %138 : vector<16xf32> to vector<16x1xf32>
    %cst_49 = arith.constant 3.125000e-02 : f32
    %140 = vector.broadcast %cst_49 : f32 to vector<16x1xf32>
    %141 = arith.mulf %139, %140 : vector<16x1xf32>
    %142 = vector.broadcast %141 : vector<16x1xf32> to vector<16x128xf32>
    %143 = arith.subf %135, %142 : vector<16x128xf32>
    %144 = vector.broadcast %4 : vector<1x128xf32> to vector<16x128xf32>
    %145 = arith.mulf %143, %144 : vector<16x128xf32>
    %146 = arith.mulf %145, %145 : vector<16x128xf32>
    %cst_50 = arith.constant dense<0.000000e+00> : vector<16xf32>
    %147 = vector.multi_reduction <add>, %146, %cst_50 [1] : vector<16x128xf32> to vector<16xf32>
    %148 = vector.shape_cast %147 : vector<16xf32> to vector<16x1xf32>
    %cst_51 = arith.constant 3.125000e-02 : f32
    %149 = vector.broadcast %cst_51 : f32 to vector<16x1xf32>
    %150 = arith.mulf %148, %149 : vector<16x1xf32>
    %cst_52 = arith.constant 9.99999996E-13 : f32
    %151 = vector.broadcast %cst_52 : f32 to vector<16x1xf32>
    %152 = arith.addf %150, %151 : vector<16x1xf32>
    %153 = math.rsqrt %152 : vector<16x1xf32>
    %154 = vector.broadcast %153 : vector<16x1xf32> to vector<16x128xf32>
    %155 = arith.mulf %145, %154 : vector<16x128xf32>
    %156 = vector.broadcast %136 : vector<1x128xf32> to vector<16x128xf32>
    %157 = arith.mulf %155, %156 : vector<16x128xf32>
    %158 = vector.broadcast %137 : vector<1x128xf32> to vector<16x128xf32>
    %159 = arith.addf %157, %158 : vector<16x128xf32>
    %c0_53 = arith.constant 0 : index
    %c0_54 = arith.constant 0 : index
    %160 = vector.load %arg13[%c0_53, %c0_54] : memref<16x128xf32, #tpu.memory_space<vmem>>, vector<16x128xf32>
    tpu.vector_store %arg13[%c0_53, %c0_54], %159 {strides = array<i32>} : memref<16x128xf32, #tpu.memory_space<vmem>>, vector<16x128xf32>,
    %c1_i32 = arith.constant 1 : i32
    %161 = arith.cmpi eq, %arg0, %c1_i32 : i32
    %162 = arith.extui %161 : i1 to i32
    %c0_i32_55 = arith.constant 0 : i32
    %163 = arith.cmpi ne, %162, %c0_i32_55 : i32
    scf.if %163 {
      "tpu.region"() ({
        %alloca = memref.alloca() : memref<2x128x128xbf16, #tpu.memory_space<vmem>>
        %c0_i32_56 = arith.constant 0 : i32
        "tpu.region"() ({
          %205 = tpu.sem_alloc : memref<!tpu.dma_semaphore, #tpu.memory_space<semaphore_mem>>
          %c0_i32_74 = arith.constant 0 : i32
          %c0_i32_75 = arith.constant 0 : i32
          %206 = tpu.memref_slice %alloca[%c0_i32_56, %c0_i32_74, %c0_i32_75] : memref<2x128x128xbf16, #tpu.memory_space<vmem>> -> memref<1x128x128xbf16, #tpu.memory_space<vmem>>
          %207 = tpu.memref_squeeze %206 : memref<1x128x128xbf16, #tpu.memory_space<vmem>> -> memref<128x128xbf16, #tpu.memory_space<vmem>>
          tpu.enqueue_dma source(%arg9 : memref<128x128xbf16, #tpu.memory_space<any>>) target(%207 : memref<128x128xbf16, #tpu.memory_space<vmem>>) target_semaphore(%205 : memref<!tpu.dma_semaphore, #tpu.memory_space<semaphore_mem>>)
          %c0_i32_76 = arith.constant 0 : i32
          %c0_i32_77 = arith.constant 0 : i32
          %208 = tpu.memref_slice %alloca[%c0_i32_56, %c0_i32_76, %c0_i32_77] : memref<2x128x128xbf16, #tpu.memory_space<vmem>> -> memref<1x128x128xbf16, #tpu.memory_space<vmem>>
          %209 = tpu.memref_squeeze %208 : memref<1x128x128xbf16, #tpu.memory_space<vmem>> -> memref<128x128xbf16, #tpu.memory_space<vmem>>
          tpu.wait_dma2 semaphore(%205 : memref<!tpu.dma_semaphore, #tpu.memory_space<semaphore_mem>>) src(%arg9 : memref<128x128xbf16, #tpu.memory_space<any>>) dst(%209 : memref<128x128xbf16, #tpu.memory_space<vmem>>)
          tpu.yield
        }) : () -> ()
        %c1_i32_57 = arith.constant 1 : i32
        "tpu.region"() ({
          %205 = tpu.sem_alloc : memref<!tpu.dma_semaphore, #tpu.memory_space<semaphore_mem>>
          %c0_i32_74 = arith.constant 0 : i32
          %c0_i32_75 = arith.constant 0 : i32
          %206 = tpu.memref_slice %alloca[%c1_i32_57, %c0_i32_74, %c0_i32_75] : memref<2x128x128xbf16, #tpu.memory_space<vmem>> -> memref<1x128x128xbf16, #tpu.memory_space<vmem>>
          %207 = tpu.memref_squeeze %206 : memref<1x128x128xbf16, #tpu.memory_space<vmem>> -> memref<128x128xbf16, #tpu.memory_space<vmem>>
          tpu.enqueue_dma source(%arg10 : memref<128x128xbf16, #tpu.memory_space<any>>) target(%207 : memref<128x128xbf16, #tpu.memory_space<vmem>>) target_semaphore(%205 : memref<!tpu.dma_semaphore, #tpu.memory_space<semaphore_mem>>)
          %c0_i32_76 = arith.constant 0 : i32
          %c0_i32_77 = arith.constant 0 : i32
          %208 = tpu.memref_slice %alloca[%c1_i32_57, %c0_i32_76, %c0_i32_77] : memref<2x128x128xbf16, #tpu.memory_space<vmem>> -> memref<1x128x128xbf16, #tpu.memory_space<vmem>>
          %209 = tpu.memref_squeeze %208 : memref<1x128x128xbf16, #tpu.memory_space<vmem>> -> memref<128x128xbf16, #tpu.memory_space<vmem>>
          tpu.wait_dma2 semaphore(%205 : memref<!tpu.dma_semaphore, #tpu.memory_space<semaphore_mem>>) src(%arg10 : memref<128x128xbf16, #tpu.memory_space<any>>) dst(%209 : memref<128x128xbf16, #tpu.memory_space<vmem>>)
          tpu.yield
        }) : () -> ()
        %c0_58 = arith.constant 0 : index
        %c0_59 = arith.constant 0 : index
        %c0_60 = arith.constant 0 : index
        %164 = vector.load %alloca[%c0_58, %c0_59, %c0_60] : memref<2x128x128xbf16, #tpu.memory_space<vmem>>, vector<1x128x128xbf16>
        %165 = vector.shape_cast %164 : vector<1x128x128xbf16> to vector<128x128xbf16>
        %c1 = arith.constant 1 : index
        %c0_61 = arith.constant 0 : index
        %c0_62 = arith.constant 0 : index
        %166 = vector.load %alloca[%c1, %c0_61, %c0_62] : memref<2x128x128xbf16, #tpu.memory_space<vmem>>, vector<1x128x128xbf16>
        %167 = vector.shape_cast %166 : vector<1x128x128xbf16> to vector<128x128xbf16>
        %168 = vector.extract_strided_slice %159 {offsets = [0, 0], sizes = [1, 128], strides = [1, 1]} : vector<16x128xf32> to vector<1x128xf32>
        %169 = vector.extract_strided_slice %159 {offsets = [8, 0], sizes = [1, 128], strides = [1, 1]} : vector<16x128xf32> to vector<1x128xf32>
        %170 = tpu.concatenate %168, %169 in 0 : vector<1x128xf32>, vector<1x128xf32> -> vector<2x128xf32>
        %171 = arith.truncf %170 : vector<2x128xf32> to vector<2x128xbf16>
        %cst_63 = arith.constant dense<0.000000e+00> : vector<2x128xf32>
        %172 = tpu.matmul %171, %165, %cst_63 {dimension_numbers = #tpu.dot_dimension_numbers<[1], [0], [0], [1], [0, 0, 1, 1], [], []>} : vector<2x128xbf16>, vector<128x128xbf16>, vector<2x128xf32> -> vector<2x128xf32>
        %173 = vector.extract_strided_slice %5 {offsets = [0, 0], sizes = [1, 128], strides = [1, 1]} : vector<8x128xf32> to vector<1x128xf32>
        %174 = vector.broadcast %173 : vector<1x128xf32> to vector<2x128xf32>
        %175 = arith.addf %172, %174 : vector<2x128xf32>
        %176 = math.tanh %175 : vector<2x128xf32>
        %177 = vector.extract_strided_slice %5 {offsets = [1, 0], sizes = [1, 128], strides = [1, 1]} : vector<8x128xf32> to vector<1x128xf32>
        %178 = vector.extract_strided_slice %5 {offsets = [2, 0], sizes = [1, 128], strides = [1, 1]} : vector<8x128xf32> to vector<1x128xf32>
        %cst_64 = arith.constant dense<0.000000e+00> : vector<2xf32>
        %179 = vector.multi_reduction <add>, %176, %cst_64 [1] : vector<2x128xf32> to vector<2xf32>
        %180 = vector.shape_cast %179 : vector<2xf32> to vector<2x1xf32>
        %cst_65 = arith.constant 3.125000e-02 : f32
        %181 = vector.broadcast %cst_65 : f32 to vector<2x1xf32>
        %182 = arith.mulf %180, %181 : vector<2x1xf32>
        %183 = vector.broadcast %182 : vector<2x1xf32> to vector<2x128xf32>
        %184 = arith.subf %176, %183 : vector<2x128xf32>
        %185 = vector.broadcast %4 : vector<1x128xf32> to vector<2x128xf32>
        %186 = arith.mulf %184, %185 : vector<2x128xf32>
        %187 = arith.mulf %186, %186 : vector<2x128xf32>
        %cst_66 = arith.constant dense<0.000000e+00> : vector<2xf32>
        %188 = vector.multi_reduction <add>, %187, %cst_66 [1] : vector<2x128xf32> to vector<2xf32>
        %189 = vector.shape_cast %188 : vector<2xf32> to vector<2x1xf32>
        %cst_67 = arith.constant 3.125000e-02 : f32
        %190 = vector.broadcast %cst_67 : f32 to vector<2x1xf32>
        %191 = arith.mulf %189, %190 : vector<2x1xf32>
        %cst_68 = arith.constant 9.99999974E-6 : f32
        %192 = vector.broadcast %cst_68 : f32 to vector<2x1xf32>
        %193 = arith.addf %191, %192 : vector<2x1xf32>
        %194 = math.rsqrt %193 : vector<2x1xf32>
        %195 = vector.broadcast %194 : vector<2x1xf32> to vector<2x128xf32>
        %196 = arith.mulf %186, %195 : vector<2x128xf32>
        %197 = vector.broadcast %177 : vector<1x128xf32> to vector<2x128xf32>
        %198 = arith.mulf %196, %197 : vector<2x128xf32>
        %199 = vector.broadcast %178 : vector<1x128xf32> to vector<2x128xf32>
        %200 = arith.addf %198, %199 : vector<2x128xf32>
        %c0_69 = arith.constant 0 : index
        %c0_70 = arith.constant 0 : index
        %201 = vector.load %arg11[%c0_69, %c0_70] : memref<2x128xf32, #tpu.memory_space<vmem>>, vector<2x128xf32>
        tpu.vector_store %arg11[%c0_69, %c0_70], %200 {strides = array<i32>} : memref<2x128xf32, #tpu.memory_space<vmem>>, vector<2x128xf32>,
        %202 = arith.truncf %200 : vector<2x128xf32> to vector<2x128xbf16>
        %cst_71 = arith.constant dense<0.000000e+00> : vector<2x128xf32>
        %203 = tpu.matmul %202, %167, %cst_71 {dimension_numbers = #tpu.dot_dimension_numbers<[1], [0], [0], [1], [0, 0, 1, 1], [], []>} : vector<2x128xbf16>, vector<128x128xbf16>, vector<2x128xf32> -> vector<2x128xf32>
        %c0_72 = arith.constant 0 : index
        %c0_73 = arith.constant 0 : index
        %204 = vector.load %arg12[%c0_72, %c0_73] : memref<2x128xf32, #tpu.memory_space<vmem>>, vector<2x128xf32>
        tpu.vector_store %arg12[%c0_72, %c0_73], %203 {strides = array<i32>} : memref<2x128xf32, #tpu.memory_space<vmem>>, vector<2x128xf32>,
        tpu.yield
      }) : () -> ()
    } else {
    }
    return
  }
  func.func @transform_0(%arg0: i32) -> (i32, i32) {
    %c0_i32 = arith.constant 0 : i32
    %c0_i32_0 = arith.constant 0 : i32
    %c0_i32_1 = arith.constant 0 : i32
    return %c0_i32, %c0_i32_0 : i32, i32
  }
  func.func @transform_1(%arg0: i32) -> (i32, i32) {
    %c0_i32 = arith.constant 0 : i32
    %c0_i32_0 = arith.constant 0 : i32
    %c0_i32_1 = arith.constant 0 : i32
    return %c0_i32, %c0_i32_0 : i32, i32
  }
  func.func @transform_2(%arg0: i32) -> (i32, i32) {
    %c0_i32 = arith.constant 0 : i32
    %c0_i32_0 = arith.constant 0 : i32
    %c0_i32_1 = arith.constant 0 : i32
    return %c0_i32, %c0_i32_0 : i32, i32
  }
  func.func @transform_3(%arg0: i32) -> (i32, i32, i32) {
    %c0_i32 = arith.constant 0 : i32
    %c0_i32_0 = arith.constant 0 : i32
    %c0_i32_1 = arith.constant 0 : i32
    return %arg0, %c0_i32, %c0_i32_0 : i32, i32, i32
  }
  func.func @transform_4(%arg0: i32) -> (i32, i32, i32) {
    %c0_i32 = arith.constant 0 : i32
    %c0_i32_0 = arith.constant 0 : i32
    %c0_i32_1 = arith.constant 0 : i32
    return %arg0, %c0_i32, %c0_i32_0 : i32, i32, i32
  }
  func.func @transform_5(%arg0: i32) -> (i32, i32, i32) {
    %c0_i32 = arith.constant 0 : i32
    %c0_i32_0 = arith.constant 0 : i32
    %c0_i32_1 = arith.constant 0 : i32
    return %arg0, %c0_i32, %c0_i32_0 : i32, i32, i32
  }
  func.func @transform_6(%arg0: i32) -> (i32, i32, i32) {
    %c0_i32 = arith.constant 0 : i32
    %c0_i32_0 = arith.constant 0 : i32
    %c0_i32_1 = arith.constant 0 : i32
    return %arg0, %c0_i32, %c0_i32_0 : i32, i32, i32
  }
  func.func @transform_7(%arg0: i32) -> (i32, i32, i32) {
    %c0_i32 = arith.constant 0 : i32
    %c0_i32_0 = arith.constant 0 : i32
    %c0_i32_1 = arith.constant 0 : i32
    return %arg0, %c0_i32, %c0_i32_0 : i32, i32, i32
  }
  func.func @transform_10(%arg0: i32) -> (i32, i32) {
    %c0_i32 = arith.constant 0 : i32
    %c0_i32_0 = arith.constant 0 : i32
    %c0_i32_1 = arith.constant 0 : i32
    return %c0_i32, %c0_i32_0 : i32, i32
  }
  func.func @transform_11(%arg0: i32) -> (i32, i32) {
    %c0_i32 = arith.constant 0 : i32
    %c0_i32_0 = arith.constant 0 : i32
    %c0_i32_1 = arith.constant 0 : i32
    return %c0_i32, %c0_i32_0 : i32, i32
  }
}

</mosaic_0001>

<llo_original>
// kernel: bert_for_latent_connector_forward.1
$region0: #{bert_for_latent_connector_forward.1}
  #allocation0 [shape = 'u32[]', space=smem, size = 0x4, offset = 0x4, fixed_abs, tag = 'smem constant byte address 0x4 - core index']
  #allocation1 [shape = 'u32[144,128]{1,0:T(1,128)}', space=vmem, size = 0x12000, scoped, tag = 'internal scratch']
  #allocation2 [shape = 'f32[16,128]{1,0:T(8,128)}', space=vmem, size = 0x2000, scoped, tag = 'scratch operand']
  #allocation13 [shape = 's32[]', space=sflag, size = 0x4, offset = 0, fixed_abs, tag = 'sflag constant byte address 0x0 - dummy sync flag']
  #allocation15 [shape = 's32[]', space=sflag, size = 0x4, offset = 0, fixed_abs, tag = 'sflag constant byte address 0x0 - dummy sync flag']
  #allocation16 [shape = 's32[]', space=sflag, size = 0x4, offset = 0, fixed_abs, tag = 'sflag constant byte address 0x0 - dummy sync flag']
  #allocation17 [shape = 'u32[]', space=smem, size = 0x4, offset = 0x44, fixed_abs, tag = 'smem constant byte address 0x44 - assertion arg 0']
  #allocation18 [shape = 'u32[]', space=smem, size = 0x4, offset = 0x48, fixed_abs, tag = 'smem constant byte address 0x48 - assertion arg 1']
  %s0 = inlined_call_operand.vmem [shape: f32[16,128], index: 0, kind: input, shape index: {}]
  %s1 = inlined_call_operand.vmem [shape: f32[16,16], index: 1, kind: input, shape index: {}]
  %s2 = inlined_call_operand.vmem [shape: f32[8,128], index: 2, kind: input, shape index: {}]
  %s3 = inlined_call_operand.vmem [shape: bf16[2,128,128], index: 3, kind: input, shape index: {}]
  %s4 = inlined_call_operand.hbm [shape: bf16[2,32,128], index: 4, kind: input, shape index: {}]
  %s5 = inlined_call_operand.vmem [shape: bf16[2,128,128], index: 5, kind: input, shape index: {}]
  %s6 = inlined_call_operand.vmem [shape: bf16[2,128,128], index: 6, kind: input, shape index: {}]
  %s7 = inlined_call_operand.hbm [shape: f32[2,8,128], index: 7, kind: input, shape index: {}]
  %s8 = inlined_call_operand.vmem [shape: bf16[128,128], index: 8, kind: input, shape index: {}]
  %s9 = inlined_call_operand.hbm [shape: bf16[128,128], index: 9, kind: input, shape index: {}]
  %s10 = inlined_call_operand.hbm [shape: f32[2,128], index: 10, kind: output, shape index: {0}]
  %s11 = inlined_call_operand.hbm [shape: f32[2,128], index: 11, kind: output, shape index: {1}]
  %12 = xla_tuple %s10, %s11
  %s13 = sld [smem:[#allocation0]]
  $region130: #{bert_for_latent_connector_forward.1} parent=0
    _
  %s15 = ssub.s32 1, %s13
  %s16 = scalar_select 0, %s15, %s13
  $region1: #{bert_for_latent_connector_forward.1} parent=0
    #allocation3 [shape = 'u8[16384]{0}', space=vmem, size = 0x4000, scoped, tag = 'input window, operand 4']
    #allocation4 [shape = 's32[2]{0}', space=sflag, size = 0x8, scoped, tag = 'scoped memory for bert_for_latent_connector_forward.1']
    #allocation5 [shape = 's32[2]{0}', space=sflag, size = 0x8, scoped, tag = 'scoped memory for bert_for_latent_connector_forward.1']
    #allocation6 [shape = 'u8[8192]{0}', space=vmem, size = 0x2000, scoped, tag = 'input window, operand 7']
    #allocation7 [shape = 's32[2]{0}', space=sflag, size = 0x8, scoped, tag = 'scoped memory for bert_for_latent_connector_forward.1']
    #allocation8 [shape = 'u8[1024]{0}', space=vmem, size = 0x400, scoped, tag = 'output window, operand 0, single buffered']
    #allocation9 [shape = 'u8[1024]{0}', space=vmem, size = 0x400, scoped, tag = 'output window, operand 1, single buffered']
    #allocation10 [shape = 's32[1]{0}', space=sflag, size = 0x4, scoped, tag = 'scoped memory for bert_for_latent_connector_forward.1']
    %17 = vsyncpa [#allocation4], 0
    %s18 = scalar_lea.sflag [#allocation4], 1
    %19 = vsyncpa %s18, 0
    %20 = vsyncpa [#allocation7], 0
    %s21 = scalar_lea.sflag [#allocation7], 1
    %22 = vsyncpa %s21, 0
    %23 = vsyncpa [#allocation5], 0
    %24 = vsyncpa [#allocation10], 0
    loop: start=0, step=1, limit=4
    $region2: #{bert_for_latent_connector_forward.1} parent=1 // loop_pre_header
      _
    $region3: #{bert_for_latent_connector_forward.1} parent=1 // loop_header
      %s26 = sphi 0, %s30
      %p27 = scmp.ge.s32.totalorder %s26, 4
      %s34 = sphi 0, %s34
      %s36 = sphi 0, %s34
      %s37 = sphi 0, %s36
      %s51 = sphi 0, %s37
      %s55 = sphi 0, %s55
      %s57 = sphi 0, %s55
      %s58 = sphi 0, %s57
      %s72 = sphi 0, %s58
      %s76 = sphi 0, %s76
      %s78 = sphi 0, %s76
      %s79 = sphi 0, %s78
      %s93 = sphi 0, %s79
      %s99 = sphi 0, %s101
      %s102 = sphi 0, %s99
      %s103 = sphi 0, %s102
      %s119 = sphi 0, %s103
      %s125 = sphi 0, %s127
      %s128 = sphi 0, %s125
      %s129 = sphi 0, %s128
      %s145 = sphi 0, %s129
      %s151 = sphi 0, %s153
      %s154 = sphi 0, %s151
      %s155 = sphi 0, %s154
      %s171 = sphi 0, %s155
      %s177 = sphi 0, %s179
      %s180 = sphi 0, %s177
      %s181 = sphi 0, %s180
      %s197 = sphi 0, %s181
      %s203 = sphi 0, %s205
      %s206 = sphi 0, %s203
      %s207 = sphi 0, %s206
      %s223 = sphi 0, %s207
      %s227 = sphi 0, %s227
      %s229 = sphi 0, %s227
      %s230 = sphi 0, %s229
      %s244 = sphi 0, %s230
      %s248 = sphi 0, %s248
      %s250 = sphi 0, %s248
      %s251 = sphi 0, %s250
      %s265 = sphi 0, %s251
    $region4: #{bert_for_latent_connector_forward.1} parent=1 // loop_header_branch
      %29 = sbr.rel (%p27) target = $region8
    $region5: #{bert_for_latent_connector_forward.1} parent=1 // loop_body
      %s31 = ssub.s32 %s26, 1
      %s32 = ssub.s32 %s26, 2
      %s33 = sadd.s32 %s26, 1
      %s35 = sadd.s32 %s34, 1
      %p38 = scmp.eq.s32.totalorder %s26, 1
      %p39 = scmp.ne.s32.totalorder %s34, %s36
      %p40 = scmp.eq.s32.totalorder %s26, 0
      %p41 = por %p39, %p40
      %p42 = scmp.ne.s32.totalorder %s34, %s36
      %p43 = scmp.eq.s32.totalorder %s31, 1
      %p44 = por %p42, %p43
      %p45 = scmp.ne.s32.totalorder %s36, %s37
      %p46 = scmp.eq.s32.totalorder %s31, 0
      %p47 = por %p45, %p46
      %p48 = scmp.ne.s32.totalorder %s36, %s37
      %p49 = scmp.eq.s32.totalorder %s32, 1
      %p50 = por %p48, %p49
      %p52 = scmp.ne.s32.totalorder %s37, %s51
      %p53 = scmp.eq.s32.totalorder %s32, 0
      %p54 = por %p52, %p53
      %s56 = sadd.s32 %s55, 1
      %p59 = scmp.eq.s32.totalorder %s26, 1
      %p60 = scmp.ne.s32.totalorder %s55, %s57
      %p61 = scmp.eq.s32.totalorder %s26, 0
      %p62 = por %p60, %p61
      %p63 = scmp.ne.s32.totalorder %s55, %s57
      %p64 = scmp.eq.s32.totalorder %s31, 1
      %p65 = por %p63, %p64
      %p66 = scmp.ne.s32.totalorder %s57, %s58
      %p67 = scmp.eq.s32.totalorder %s31, 0
      %p68 = por %p66, %p67
      %p69 = scmp.ne.s32.totalorder %s57, %s58
      %p70 = scmp.eq.s32.totalorder %s32, 1
      %p71 = por %p69, %p70
      %p73 = scmp.ne.s32.totalorder %s58, %s72
      %p74 = scmp.eq.s32.totalorder %s32, 0
      %p75 = por %p73, %p74
      %s77 = sadd.s32 %s76, 1
      %p80 = scmp.eq.s32.totalorder %s26, 1
      %p81 = scmp.ne.s32.totalorder %s76, %s78
      %p82 = scmp.eq.s32.totalorder %s26, 0
      %p83 = por %p81, %p82
      %p84 = scmp.ne.s32.totalorder %s76, %s78
      %p85 = scmp.eq.s32.totalorder %s31, 1
      %p86 = por %p84, %p85
      %p87 = scmp.ne.s32.totalorder %s78, %s79
      %p88 = scmp.eq.s32.totalorder %s31, 0
      %p89 = por %p87, %p88
      %p90 = scmp.ne.s32.totalorder %s78, %s79
      %p91 = scmp.eq.s32.totalorder %s32, 1
      %p92 = por %p90, %p91
      %p94 = scmp.ne.s32.totalorder %s79, %s93
      %p95 = scmp.eq.s32.totalorder %s32, 0
      %p96 = por %p94, %p95
      %s97 = ssub.s32 %s26, %s33
      %p98 = scmp.eq.s32.totalorder %s97, 0
      %s100 = sadd.s32 %s99, 1
      %s101 = scalar_select %p98, %s99, %s100
      %p104 = pneg %p98
      %p105 = scmp.eq.s32.totalorder %s26, 1
      %p106 = por %p104, %p105
      %p107 = scmp.ne.s32.totalorder %s99, %s102
      %p108 = scmp.eq.s32.totalorder %s26, 0
      %p109 = por %p107, %p108
      %p110 = scmp.ne.s32.totalorder %s99, %s102
      %p111 = scmp.eq.s32.totalorder %s31, 1
      %p112 = por %p110, %p111
      %p113 = scmp.ne.s32.totalorder %s102, %s103
      %p114 = scmp.eq.s32.totalorder %s31, 0
      %p115 = por %p113, %p114
      %p116 = scmp.ne.s32.totalorder %s102, %s103
      %p117 = scmp.eq.s32.totalorder %s32, 1
      %p118 = por %p116, %p117
      %p120 = scmp.ne.s32.totalorder %s103, %s119
      %p121 = scmp.eq.s32.totalorder %s32, 0
      %p122 = por %p120, %p121
      %s123 = ssub.s32 %s26, %s33
      %p124 = scmp.eq.s32.totalorder %s123, 0
      %s126 = sadd.s32 %s125, 1
      %s127 = scalar_select %p124, %s125, %s126
      %p130 = pneg %p124
      %p131 = scmp.eq.s32.totalorder %s26, 1
      %p132 = por %p130, %p131
      %p133 = scmp.ne.s32.totalorder %s125, %s128
      %p134 = scmp.eq.s32.totalorder %s26, 0
      %p135 = por %p133, %p134
      %p136 = scmp.ne.s32.totalorder %s125, %s128
      %p137 = scmp.eq.s32.totalorder %s31, 1
      %p138 = por %p136, %p137
      %p139 = scmp.ne.s32.totalorder %s128, %s129
      %p140 = scmp.eq.s32.totalorder %s31, 0
      %p141 = por %p139, %p140
      %p142 = scmp.ne.s32.totalorder %s128, %s129
      %p143 = scmp.eq.s32.totalorder %s32, 1
      %p144 = por %p142, %p143
      %p146 = scmp.ne.s32.totalorder %s129, %s145
      %p147 = scmp.eq.s32.totalorder %s32, 0
      %p148 = por %p146, %p147
      %s149 = ssub.s32 %s26, %s33
      %p150 = scmp.eq.s32.totalorder %s149, 0
      %s152 = sadd.s32 %s151, 1
      %s153 = scalar_select %p150, %s151, %s152
      %p156 = pneg %p150
      %p157 = scmp.eq.s32.totalorder %s26, 1
      %p158 = por %p156, %p157
      %p159 = scmp.ne.s32.totalorder %s151, %s154
      %p160 = scmp.eq.s32.totalorder %s26, 0
      %p161 = por %p159, %p160
      %p162 = scmp.ne.s32.totalorder %s151, %s154
      %p163 = scmp.eq.s32.totalorder %s31, 1
      %p164 = por %p162, %p163
      %p165 = scmp.ne.s32.totalorder %s154, %s155
      %p166 = scmp.eq.s32.totalorder %s31, 0
      %p167 = por %p165, %p166
      %p168 = scmp.ne.s32.totalorder %s154, %s155
      %p169 = scmp.eq.s32.totalorder %s32, 1
      %p170 = por %p168, %p169
      %p172 = scmp.ne.s32.totalorder %s155, %s171
      %p173 = scmp.eq.s32.totalorder %s32, 0
      %p174 = por %p172, %p173
      %s175 = ssub.s32 %s26, %s33
      %p176 = scmp.eq.s32.totalorder %s175, 0
      %s178 = sadd.s32 %s177, 1
      %s179 = scalar_select %p176, %s177, %s178
      %p182 = pneg %p176
      %p183 = scmp.eq.s32.totalorder %s26, 1
      %p184 = por %p182, %p183
      %p185 = scmp.ne.s32.totalorder %s177, %s180
      %p186 = scmp.eq.s32.totalorder %s26, 0
      %p187 = por %p185, %p186
      %p188 = scmp.ne.s32.totalorder %s177, %s180
      %p189 = scmp.eq.s32.totalorder %s31, 1
      %p190 = por %p188, %p189
      %p191 = scmp.ne.s32.totalorder %s180, %s181
      %p192 = scmp.eq.s32.totalorder %s31, 0
      %p193 = por %p191, %p192
      %p194 = scmp.ne.s32.totalorder %s180, %s181
      %p195 = scmp.eq.s32.totalorder %s32, 1
      %p196 = por %p194, %p195
      %p198 = scmp.ne.s32.totalorder %s181, %s197
      %p199 = scmp.eq.s32.totalorder %s32, 0
      %p200 = por %p198, %p199
      %s201 = ssub.s32 %s26, %s33
      %p202 = scmp.eq.s32.totalorder %s201, 0
      %s204 = sadd.s32 %s203, 1
      %s205 = scalar_select %p202, %s203, %s204
      %p208 = pneg %p202
      %p209 = scmp.eq.s32.totalorder %s26, 1
      %p210 = por %p208, %p209
      %p211 = scmp.ne.s32.totalorder %s203, %s206
      %p212 = scmp.eq.s32.totalorder %s26, 0
      %p213 = por %p211, %p212
      %p214 = scmp.ne.s32.totalorder %s203, %s206
      %p215 = scmp.eq.s32.totalorder %s31, 1
      %p216 = por %p214, %p215
      %p217 = scmp.ne.s32.totalorder %s206, %s207
      %p218 = scmp.eq.s32.totalorder %s31, 0
      %p219 = por %p217, %p218
      %p220 = scmp.ne.s32.totalorder %s206, %s207
      %p221 = scmp.eq.s32.totalorder %s32, 1
      %p222 = por %p220, %p221
      %p224 = scmp.ne.s32.totalorder %s207, %s223
      %p225 = scmp.eq.s32.totalorder %s32, 0
      %p226 = por %p224, %p225
      %s228 = sadd.s32 %s227, 1
      %p231 = scmp.eq.s32.totalorder %s26, 1
      %p232 = scmp.ne.s32.totalorder %s227, %s229
      %p233 = scmp.eq.s32.totalorder %s26, 0
      %p234 = por %p232, %p233
      %p235 = scmp.ne.s32.totalorder %s227, %s229
      %p236 = scmp.eq.s32.totalorder %s31, 1
      %p237 = por %p235, %p236
      %p238 = scmp.ne.s32.totalorder %s229, %s230
      %p239 = scmp.eq.s32.totalorder %s31, 0
      %p240 = por %p238, %p239
      %p241 = scmp.ne.s32.totalorder %s229, %s230
      %p242 = scmp.eq.s32.totalorder %s32, 1
      %p243 = por %p241, %p242
      %p245 = scmp.ne.s32.totalorder %s230, %s244
      %p246 = scmp.eq.s32.totalorder %s32, 0
      %p247 = por %p245, %p246
      %s249 = sadd.s32 %s248, 1
      %p252 = scmp.eq.s32.totalorder %s26, 1
      %p253 = scmp.ne.s32.totalorder %s248, %s250
      %p254 = scmp.eq.s32.totalorder %s26, 0
      %p255 = por %p253, %p254
      %p256 = scmp.ne.s32.totalorder %s248, %s250
      %p257 = scmp.eq.s32.totalorder %s31, 1
      %p258 = por %p256, %p257
      %p259 = scmp.ne.s32.totalorder %s250, %s251
      %p260 = scmp.eq.s32.totalorder %s31, 0
      %p261 = por %p259, %p260
      %p262 = scmp.ne.s32.totalorder %s250, %s251
      %p263 = scmp.eq.s32.totalorder %s32, 1
      %p264 = por %p262, %p263
      %p266 = scmp.ne.s32.totalorder %s251, %s265
      %p267 = scmp.eq.s32.totalorder %s32, 0
      %p268 = por %p266, %p267
      %p269 = scmp.le.s32.totalorder 1, %s26
      %p270 = scmp.lt.s32.totalorder %s26, 3
      %p271 = pnand %p269, %p270
      %p272 = pneg %p271
      // Predicated region
      $region9: #{bert_for_latent_connector_forward.1} parent=5 // pred_check
        _
      $region10: #{bert_for_latent_connector_forward.1} parent=5 // pred_check_branch
        %274 = sbr.rel (%p271) target = $region12
      $region11: #{bert_for_latent_connector_forward.1} parent=5 // pred_region
        %s275 = ssub.s32 %s26, 1
        // Predicated region
        $region13: #{bert_for_latent_connector_forward.1} parent=11 // pred_check
          %p276 = pneg %p47
        $region14: #{bert_for_latent_connector_forward.1} parent=11 // pred_check_branch
          %278 = sbr.rel (%p276) target = $region16
        $region15: #{bert_for_latent_connector_forward.1} parent=11 // pred_region
          _
        $region16: #{bert_for_latent_connector_forward.1} parent=11 // pred_fallthru
          _
        // Predicated region
        $region17: #{bert_for_latent_connector_forward.1} parent=11 // pred_check
          %p279 = pneg %p68
        $region18: #{bert_for_latent_connector_forward.1} parent=11 // pred_check_branch
          %281 = sbr.rel (%p279) target = $region20
        $region19: #{bert_for_latent_connector_forward.1} parent=11 // pred_region
          _
        $region20: #{bert_for_latent_connector_forward.1} parent=11 // pred_fallthru
          _
        // Predicated region
        $region21: #{bert_for_latent_connector_forward.1} parent=11 // pred_check
          %p282 = pneg %p89
        $region22: #{bert_for_latent_connector_forward.1} parent=11 // pred_check_branch
          %284 = sbr.rel (%p282) target = $region24
        $region23: #{bert_for_latent_connector_forward.1} parent=11 // pred_region
          _
        $region24: #{bert_for_latent_connector_forward.1} parent=11 // pred_fallthru
          _
      $region12: #{bert_for_latent_connector_forward.1} parent=5 // pred_fallthru
        _
      %p285 = scmp.lt.s32.totalorder %s26, 2
      // Predicated region
      $region25: #{bert_for_latent_connector_forward.1} parent=5 // pred_check
        %p286 = pneg %p285
      $region26: #{bert_for_latent_connector_forward.1} parent=5 // pred_check_branch
        %288 = sbr.rel (%p286) target = $region28
      $region27: #{bert_for_latent_connector_forward.1} parent=5 // pred_region
        // Predicated region
        $region29: #{bert_for_latent_connector_forward.1} parent=27 // pred_check
          %p289 = pneg %p109
        $region30: #{bert_for_latent_connector_forward.1} parent=27 // pred_check_branch
          %291 = sbr.rel (%p289) target = $region32
        $region31: #{bert_for_latent_connector_forward.1} parent=27 // pred_region
          %p292 = scmp.lt.s32.totalorder %s26, 1
          %s293 = scalar_select %p292, %s26, 1
          %s294 = smul.addr %s293, 16
          %s295 = smul.addr %s294, 4
          %s296 = scalar_lea.vmem %s3, %s295
        $region32: #{bert_for_latent_connector_forward.1} parent=27 // pred_fallthru
          _
        // Predicated region
        $region33: #{bert_for_latent_connector_forward.1} parent=27 // pred_check
          %p297 = pneg %p135
        $region34: #{bert_for_latent_connector_forward.1} parent=27 // pred_check_branch
          %299 = sbr.rel (%p297) target = $region36
        $region35: #{bert_for_latent_connector_forward.1} parent=27 // pred_region
          %s300 = sand.u32 %s125, 1
          %s301 = scalar_lea.sflag [#allocation4], %s300
          %s302 = sand.u32 %s125, 1
          %s303 = smul.addr %s302, 16
          %s304 = scalar_lea.vmem [#allocation3], %s303
          %s306 = ssub.s32 256, 256
          %307 = vsyncadd %s301, %s306
          %s308 = smul.addr %s26, 4
          %s309 = smul.addr %s308, 64
          %s310 = scalar_lea.hbm %s4, %s309
          %s311 = sshll.u32 %s304, 4
          %s312 = int_to_ptr.vmem [resolvable:$true] %s311
          %317 = dma.hbm_to_vmem [thread:$0]  %s310, 256, %s312, %s301, 64, 64, 4
        $region36: #{bert_for_latent_connector_forward.1} parent=27 // pred_fallthru
          _
        // Predicated region
        $region37: #{bert_for_latent_connector_forward.1} parent=27 // pred_check
          %p318 = pneg %p161
        $region38: #{bert_for_latent_connector_forward.1} parent=27 // pred_check_branch
          %320 = sbr.rel (%p318) target = $region40
        $region39: #{bert_for_latent_connector_forward.1} parent=27 // pred_region
          %p321 = scmp.lt.s32.totalorder %s26, 1
          %s322 = scalar_select %p321, %s26, 1
          %s323 = smul.addr %s322, 16
          %s324 = smul.addr %s323, 4
          %s325 = scalar_lea.vmem %s5, %s324
        $region40: #{bert_for_latent_connector_forward.1} parent=27 // pred_fallthru
          _
        // Predicated region
        $region41: #{bert_for_latent_connector_forward.1} parent=27 // pred_check
          %p326 = pneg %p187
        $region42: #{bert_for_latent_connector_forward.1} parent=27 // pred_check_branch
          %328 = sbr.rel (%p326) target = $region44
        $region43: #{bert_for_latent_connector_forward.1} parent=27 // pred_region
          %p329 = scmp.lt.s32.totalorder %s26, 1
          %s330 = scalar_select %p329, %s26, 1
          %s331 = smul.addr %s330, 16
          %s332 = smul.addr %s331, 4
          %s333 = scalar_lea.vmem %s6, %s332
        $region44: #{bert_for_latent_connector_forward.1} parent=27 // pred_fallthru
          _
        // Predicated region
        $region45: #{bert_for_latent_connector_forward.1} parent=27 // pred_check
          %p334 = pneg %p213
        $region46: #{bert_for_latent_connector_forward.1} parent=27 // pred_check_branch
          %336 = sbr.rel (%p334) target = $region48
        $region47: #{bert_for_latent_connector_forward.1} parent=27 // pred_region
          %s337 = sand.u32 %s203, 1
          %s338 = scalar_lea.sflag [#allocation7], %s337
          %s339 = sand.u32 %s203, 1
          %s340 = smul.addr %s339, 8
          %s341 = scalar_lea.vmem [#allocation6], %s340
          %s343 = ssub.s32 128, 128
          %344 = vsyncadd %s338, %s343
          %s345 = smul.addr %s26, 128
          %s346 = scalar_lea.hbm %s7, %s345
          %s348 = sshll.u32 %s341, 4
          %s349 = int_to_ptr.vmem [resolvable:$true] %s348
          %351 = dma.hbm_to_vmem [thread:$0]  %s346, 128, %s349, %s338
        $region48: #{bert_for_latent_connector_forward.1} parent=27 // pred_fallthru
          _
      $region28: #{bert_for_latent_connector_forward.1} parent=5 // pred_fallthru
        _
      %p352 = scmp.le.s32.totalorder 1, %s26
      %p353 = scmp.lt.s32.totalorder %s26, 3
      %p354 = pnand %p352, %p353
      %p355 = pneg %p354
      // Predicated region
      $region49: #{bert_for_latent_connector_forward.1} parent=5 // pred_check
        _
      $region50: #{bert_for_latent_connector_forward.1} parent=5 // pred_check_branch
        %357 = sbr.rel (%p354) target = $region52
      $region51: #{bert_for_latent_connector_forward.1} parent=5 // pred_region
        %s358 = ssub.s32 %s26, 1
        %s359 = sand.u32 %s128, 1
        %s360 = scalar_lea.sflag [#allocation4], %s359
        %s361 = sand.u32 %s128, 1
        %s362 = smul.addr %s361, 16
        %s363 = scalar_lea.vmem [#allocation3], %s362
        // Predicated region
        $region53: #{bert_for_latent_connector_forward.1} parent=51 // pred_check
          %p364 = pneg %p141
        $region54: #{bert_for_latent_connector_forward.1} parent=51 // pred_check_branch
          %366 = sbr.rel (%p364) target = $region56
        $region55: #{bert_for_latent_connector_forward.1} parent=51 // pred_region
          %367 = dma.done %s360, 256
        $region56: #{bert_for_latent_connector_forward.1} parent=51 // pred_fallthru
          _
        %s368 = sand.u32 %s206, 1
        %s369 = scalar_lea.sflag [#allocation7], %s368
        %s370 = sand.u32 %s206, 1
        %s371 = smul.addr %s370, 8
        %s372 = scalar_lea.vmem [#allocation6], %s371
        // Predicated region
        $region57: #{bert_for_latent_connector_forward.1} parent=51 // pred_check
          %p373 = pneg %p219
        $region58: #{bert_for_latent_connector_forward.1} parent=51 // pred_check_branch
          %375 = sbr.rel (%p373) target = $region60
        $region59: #{bert_for_latent_connector_forward.1} parent=51 // pred_region
          %376 = dma.done %s369, 128
        $region60: #{bert_for_latent_connector_forward.1} parent=51 // pred_fallthru
          _
        %p377 = pneg %p47
        %p378 = pneg %p44
        %p379 = pneg %p68
        %p380 = pneg %p65
        %p381 = pneg %p89
        %p382 = pneg %p86
        %p383 = scmp.lt.s32.totalorder %s31, 1
        %s384 = scalar_select %p383, %s31, 1
        %s385 = smul.addr %s384, 16
        %s386 = smul.addr %s385, 4
        %s387 = scalar_lea.vmem %s3, %s386
        %p388 = pneg %p115
        %p389 = pneg %p112
        %s390 = sand.u32 %s128, 1
        %s391 = scalar_lea.sflag [#allocation4], %s390
        %s392 = sand.u32 %s128, 1
        %s393 = smul.addr %s392, 16
        %s394 = scalar_lea.vmem [#allocation3], %s393
        %p395 = pneg %p141
        %p396 = pneg %p138
        %p397 = scmp.lt.s32.totalorder %s31, 1
        %s398 = scalar_select %p397, %s31, 1
        %s399 = smul.addr %s398, 16
        %s400 = smul.addr %s399, 4
        %s401 = scalar_lea.vmem %s5, %s400
        %p402 = pneg %p167
        %p403 = pneg %p164
        %p404 = scmp.lt.s32.totalorder %s31, 1
        %s405 = scalar_select %p404, %s31, 1
        %s406 = smul.addr %s405, 16
        %s407 = smul.addr %s406, 4
        %s408 = scalar_lea.vmem %s6, %s407
        %p409 = pneg %p193
        %p410 = pneg %p190
        %s411 = sand.u32 %s206, 1
        %s412 = scalar_lea.sflag [#allocation7], %s411
        %s413 = sand.u32 %s206, 1
        %s414 = smul.addr %s413, 8
        %s415 = scalar_lea.vmem [#allocation6], %s414
        %p416 = pneg %p219
        %p417 = pneg %p216
        %p418 = pneg %p240
        %p419 = pneg %p237
        %p420 = pneg %p261
        %p421 = pneg %p258
        %p422 = scmp.lt.s32.totalorder %s31, 1
        %s423 = scalar_select %p422, %s31, 1
        %s424 = smul.addr %s423, 16
        %s425 = smul.addr %s424, 4
        %s426 = scalar_lea.vmem %s3, %s425
        %p427 = scmp.lt.s32.totalorder %s31, 1
        %s428 = scalar_select %p427, %s31, 1
        %s429 = smul.addr %s428, 16
        %s430 = smul.addr %s429, 4
        %s431 = scalar_lea.vmem %s5, %s430
        %p432 = scmp.lt.s32.totalorder %s31, 1
        %s433 = scalar_select %p432, %s31, 1
        %s434 = smul.addr %s433, 16
        %s435 = smul.addr %s434, 4
        %s436 = scalar_lea.vmem %s6, %s435
        %v438 = vlaneseq
        %v439 = vand.u32 %v438, 127
        %vm440 = vcmp.lt.s32.totalorder %v439, 32
        %v441 = vsel %vm440, 1, 0
        %v442 = vcvt.s32.f32 %v441
        %v443 = vld [vmem:[%s2] sm:$0xff]
        %p444 = scmp.eq.s32.totalorder %s31, 0
        // Predicated region
        $region61: #{bert_for_latent_connector_forward.1} parent=51 // pred_check
          %p445 = pneg %p444
        $region62: #{bert_for_latent_connector_forward.1} parent=51 // pred_check_branch
          %447 = sbr.rel (%p445) target = $region64
        $region63: #{bert_for_latent_connector_forward.1} parent=51 // pred_region
          %v448 = vld [vmem:[%s0] sm:$0xff]
          %v449 = vld [vmem:[%s0 + $0x8] sm:$0xff]
          %450 = vadd.xlane.f32.xlu0 %v448
          %v451 = vpop.xlane.xlu0 %450
          %452 = vadd.xlane.f32.xlu0 %v449
          %v453 = vpop.xlane.xlu0 %452
          %v454 = vmul.f32 %v451, 0.03125
          %v455 = vmul.f32 %v453, 0.03125
          %v456 = vsub.f32 %v448, %v454
          %v457 = vsub.f32 %v449, %v455
          %v458 = vmul.f32 %v456, %v442
          %v459 = vmul.f32 %v457, %v442
          %v460 = vmul.f32 %v458, %v458
          %v461 = vmul.f32 %v459, %v459
          %462 = vadd.xlane.f32.xlu0 %v460
          %v463 = vpop.xlane.xlu0 %462
          %464 = vadd.xlane.f32.xlu0 %v461
          %v465 = vpop.xlane.xlu0 %464
          %v466 = vmul.f32 %v463, 0.03125
          %v467 = vmul.f32 %v465, 0.03125
          %v468 = vadd.f32 %v466, 1e-12
          %v469 = vadd.f32 %v467, 1e-12
          %v470 = vrsqrt.pop %v468
          %v471 = vrsqrt.pop %v469
          %v472 = vmul.f32 %v458, %v470
          %v473 = vmul.f32 %v459, %v471
          %v474 = vlaneseq
          %v475 = vshrl.u32 %v474, 7
          %v476 = vsub.s32 3, %v475
          %v477 = vrot.slane %v443, %v476
          %v478 = vmul.f32 %v472, %v477
          %v479 = vmul.f32 %v473, %v477
          %v480 = vlaneseq
          %v481 = vshrl.u32 %v480, 7
          %v482 = vsub.s32 4, %v481
          %v483 = vrot.slane %v443, %v482
          %v484 = vadd.f32 %v478, %v483
          %v485 = vadd.f32 %v479, %v483
          %486 = vst [vmem:[#allocation2] sm:$0xff] %v484
          %487 = vst [vmem:[#allocation2 + $0x8] sm:$0xff] %v485
        $region64: #{bert_for_latent_connector_forward.1} parent=51 // pred_fallthru
          _
        %v488 = vld [vmem:[#allocation2] sm:$0xff]
        %v489 = vld [vmem:[#allocation2 + $0x8] sm:$0xff]
        %v490 = vld [vmem:[%s372] sm:$0xff]
        %v491 = vld [vmem:[%s426] sm:$0xf]
        %v492 = vld [vmem:[%s426 + $0x4] sm:$0xf]
        %v493 = vld [vmem:[%s426 + $0x8] sm:$0xf]
        %v494 = vld [vmem:[%s426 + $0xc] sm:$0xf]
        %v495 = vld [vmem:[%s426 + $0x10] sm:$0xf]
        %v496 = vld [vmem:[%s426 + $0x14] sm:$0xf]
        %v497 = vld [vmem:[%s426 + $0x18] sm:$0xf]
        %v498 = vld [vmem:[%s426 + $0x1c] sm:$0xf]
        %v499 = vld [vmem:[%s426 + $0x20] sm:$0xf]
        %v500 = vld [vmem:[%s426 + $0x24] sm:$0xf]
        %v501 = vld [vmem:[%s426 + $0x28] sm:$0xf]
        %v502 = vld [vmem:[%s426 + $0x2c] sm:$0xf]
        %v503 = vld [vmem:[%s426 + $0x30] sm:$0xf]
        %v504 = vld [vmem:[%s426 + $0x34] sm:$0xf]
        %v505 = vld [vmem:[%s426 + $0x38] sm:$0xf]
        %v506 = vld [vmem:[%s426 + $0x3c] sm:$0xf]
        %v507 = vld [vmem:[%s363] sm:$0xf]
        %v508 = vld [vmem:[%s363 + $0x4] sm:$0xf]
        %v509 = vld [vmem:[%s363 + $0x8] sm:$0xf]
        %v510 = vld [vmem:[%s363 + $0xc] sm:$0xf]
        %v511 = vld [vmem:[%s1] sm:$0xff]
        %v512 = vld [vmem:[%s1 + $0x8] sm:$0xff]
        %v513 = vpack.c.bf16 %v489, %v488
        %v514 = vlaneseq
        %v515 = vshrl.u32 %v514, 7
        %v516 = vsub.s32 7, %v515
        %v517 = vrot.slane %v490, %v516
        %v534 = vunpack.c.l.b16 %v491
        %v535 = vunpack.c.l.b16 %v492
        %v536 = vunpack.c.l.b16 %v493
        %v537 = vunpack.c.l.b16 %v494
        %v538 = vunpack.c.l.b16 %v495
        %v539 = vunpack.c.l.b16 %v496
        %v540 = vunpack.c.l.b16 %v497
        %v541 = vunpack.c.l.b16 %v498
        %v542 = vunpack.c.l.b16 %v499
        %v543 = vunpack.c.l.b16 %v500
        %v544 = vunpack.c.l.b16 %v501
        %v545 = vunpack.c.l.b16 %v502
        %v546 = vunpack.c.l.b16 %v503
        %v547 = vunpack.c.l.b16 %v504
        %v548 = vunpack.c.l.b16 %v505
        %v549 = vunpack.c.l.b16 %v506
        %v550 = vpack.c.b16 %v535, %v534
        %v551 = vpack.c.b16 %v537, %v536
        %v552 = vpack.c.b16 %v539, %v538
        %v553 = vpack.c.b16 %v541, %v540
        %v554 = vpack.c.b16 %v543, %v542
        %v555 = vpack.c.b16 %v545, %v544
        %v556 = vpack.c.b16 %v547, %v546
        %v557 = vpack.c.b16 %v549, %v548
        %566 = vmatprep.subr.bf16.mxu0 0
        %567 = vmatpush1.bf16.msra.mxu0 %v550
        %568 = vmatprep.subr.bf16.mxu0 0
        %569 = vmatpush1.bf16.msra.mxu0 %v551
        %570 = vmatprep.subr.bf16.mxu0 0
        %571 = vmatpush1.bf16.msra.mxu0 %v552
        %572 = vmatprep.subr.bf16.mxu0 0
        %573 = vmatpush1.bf16.msra.mxu0 %v553
        %574 = vmatprep.subr.bf16.mxu0 0
        %575 = vmatpush1.bf16.msra.mxu0 %v554
        %576 = vmatprep.subr.bf16.mxu0 0
        %577 = vmatpush1.bf16.msra.mxu0 %v555
        %578 = vmatprep.subr.bf16.mxu0 0
        %579 = vmatpush1.bf16.msra.mxu0 %v556
        %580 = vmatprep.subr.bf16.mxu0 0
        %581 = vmatpush1.bf16.msra.mxu0 %v557
        %582 = vmatprep.subr.bf16.mxu0 0
        %583 = vmatpush1.bf16.msra.mxu0 0
        %584 = vmatprep.subr.bf16.mxu0 0
        %585 = vmatpush1.bf16.msra.mxu0 0
        %586 = vmatprep.subr.bf16.mxu0 0
        %587 = vmatpush1.bf16.msra.mxu0 0
        %588 = vmatprep.subr.bf16.mxu0 0
        %589 = vmatpush1.bf16.msra.mxu0 0
        %590 = vmatprep.subr.bf16.mxu0 0
        %591 = vmatpush1.bf16.msra.mxu0 0
        %592 = vmatprep.subr.bf16.mxu0 0
        %593 = vmatpush1.bf16.msra.mxu0 0
        %594 = vmatprep.subr.bf16.mxu0 0
        %595 = vmatpush1.bf16.msra.mxu0 0
        %596 = vmatprep.subr.bf16.mxu0 0
        %597 = vmatpush1.bf16.msra.mxu0 0
        %598 = vmatprep.mubr.bf16.mxu0 0
        %599 = vmatmul.mubr.bf16.gmra.mrb[0].mxu0 %v513
        %v600 = vpop.f32.mrb[0].mxu0
        %v601 = vadd.f32 %v517, %v600
        %v602 = vpop.f32.mrb[0].mxu0
        %v603 = vpop.f32.mrb[0].mxu0
        %v604 = vadd.f32 %v517, %v603
        %v605 = vpop.f32.mrb[0].mxu0
        %606 = vdwg.mxu0
        %609 = vrot.lane.b32.xlu0 %v601, 96
        %v610 = vpop.permute.xlu0 %609
        %611 = vrot.lane.b32.xlu0 %v604, 96
        %v612 = vpop.permute.xlu0 %611
        %vm613 = vcmask 64512
        %v614 = vsel %vm613, %v601, 0
        %v616 = vsel %vm613, %v604, 0
        %v618 = vsel %vm613, %v610, 0
        %v620 = vsel %vm613, %v612, 0
        %622 = vmatprep.subr.mxu0 0.0
        %623 = vmatpush1.xpose.msra.mxu0 %v618
        %624 = vmatprep.subr.mxu0 0.0
        %625 = vmatpush1.xpose.msra.mxu0 %v620
        %626 = vmatprep.subr.mxu0 0.0
        %627 = vmatpush1.xpose.msra.mxu0 0.0
        %628 = vmatprep.subr.mxu0 0.0
        %629 = vmatpush1.xpose.msra.mxu0 0.0
        %630 = vmatprep.subr.mxu0 0.0
        %631 = vmatpush1.xpose.msra.mxu0 0.0
        %632 = vmatprep.subr.mxu0 0.0
        %633 = vmatpush1.xpose.msra.mxu0 0.0
        %634 = vmatprep.subr.mxu0 0.0
        %635 = vmatpush1.xpose.msra.mxu0 0.0
        %636 = vmatprep.subr.mxu0 0.0
        %637 = vmatpush1.xpose.msra.mxu0 0.0
        %638 = vmatprep.subr.mxu0 0.0
        %639 = vmatpush1.xpose.msra.mxu0 0.0
        %640 = vmatprep.subr.mxu0 0.0
        %641 = vmatpush1.xpose.msra.mxu0 0.0
        %642 = vmatprep.subr.mxu0 0.0
        %643 = vmatpush1.xpose.msra.mxu0 0.0
        %644 = vmatprep.subr.mxu0 0.0
        %645 = vmatpush1.xpose.msra.mxu0 0.0
        %646 = vmatprep.subr.mxu0 0.0
        %647 = vmatpush1.xpose.msra.mxu0 0.0
        %648 = vmatprep.subr.mxu0 0.0
        %649 = vmatpush1.xpose.msra.mxu0 0.0
        %650 = vmatprep.subr.mxu0 0.0
        %651 = vmatpush1.xpose.msra.mxu0 0.0
        %652 = vmatprep.subr.mxu0 0.0
        %653 = vmatpush1.xpose.msra.mxu0 0.0
        %654 = vmatprep.subr.mxu0 0.0
        %655 = vmatpush1.xpose.msra.mxu0 0.0
        %656 = vmatprep.subr.mxu0 0.0
        %657 = vmatpush1.xpose.msra.mxu0 0.0
        %658 = vmatprep.subr.mxu0 0.0
        %659 = vmatpush1.xpose.msra.mxu0 0.0
        %660 = vmatprep.subr.mxu0 0.0
        %661 = vmatpush1.xpose.msra.mxu0 0.0
        %662 = vmatprep.subr.mxu0 0.0
        %663 = vmatpush1.xpose.msra.mxu0 0.0
        %664 = vmatprep.subr.mxu0 0.0
        %665 = vmatpush1.xpose.msra.mxu0 0.0
        %666 = vmatprep.subr.mxu0 0.0
        %667 = vmatpush1.xpose.msra.mxu0 0.0
        %668 = vmatprep.subr.mxu0 0.0
        %669 = vmatpush1.xpose.msra.mxu0 0.0
        %670 = vmatprep.subr.mxu0 0.0
        %671 = vmatpush1.xpose.msra.mxu0 0.0
        %672 = vmatprep.subr.mxu0 0.0
        %673 = vmatpush1.xpose.msra.mxu0 0.0
        %674 = vmatprep.subr.mxu0 0.0
        %675 = vmatpush1.xpose.msra.mxu0 0.0
        %676 = vmatprep.subr.mxu0 0.0
        %677 = vmatpush1.xpose.msra.mxu0 0.0
        %678 = vmatprep.subr.mxu0 0.0
        %679 = vmatpush1.xpose.msra.mxu0 0.0
        %680 = vmatprep.subr.mxu0 0.0
        %681 = vmatpush1.xpose.msra.mxu0 0.0
        %682 = vmatprep.subr.mxu0 0.0
        %683 = vmatpush1.xpose.msra.mxu0 0.0
        %684 = vmatprep.subr.mxu0 0.0
        %685 = vmatpush1.xpose.msra.mxu0 0.0
        %686 = vmatprep.mubr.f32.mxu0 0.0
        %687 = vmatmul.mubr.f32.gmra.mrb[0].mxu0 %v614
        %v688 = vpop.f32.mrb[0].mxu0
        %v689 = vadd.f32 %v511, %v688
        %v690 = vpop.f32.mrb[0].mxu0
        %691 = vmatprep.mubr.f32.mxu0 0.0
        %692 = vmatmul.mubr.f32.gmra.mrb[0].mxu0 %v616
        %v693 = vpop.f32.mrb[0].mxu0
        %v694 = vadd.f32 %v512, %v693
        %v695 = vpop.f32.mrb[0].mxu0
        %696 = vdwg.mxu0
        %vm697 = vcmask 130048
        %v698 = vsel %vm697, %v689, -inf
        %699 = vmax.xlane.f32.xlu0 %v698
        %v700 = vpop.xlane.xlu0 %699
        %v701 = vsel %vm697, %v694, -inf
        %702 = vmax.xlane.f32.xlu0 %v701
        %v703 = vpop.xlane.xlu0 %702
        %v704 = vsub.f32 %v689, %v700
        %v705 = vsub.f32 %v694, %v703
        %v706 = vmul.f32 %v704, 1.442695
        %v707 = vpow.pop %v706
        %v708 = vmul.f32 %v705, 1.442695
        %v709 = vpow.pop %v708
        %v710 = vsel %vm697, %v707, 0.0
        %711 = vadd.xlane.f32.xlu0 %v710
        %v712 = vpop.xlane.xlu0 %711
        %v713 = vsel %vm697, %v709, 0.0
        %714 = vadd.xlane.f32.xlu0 %v713
        %v715 = vpop.xlane.xlu0 %714
        %v716 = vrcp.pop %v712
        %v717 = vmul.f32 %v707, %v716
        %v718 = vrcp.pop %v715
        %v719 = vmul.f32 %v709, %v718
        %720 = vrot.lane.b32.xlu0 %v601, 64
        %v721 = vpop.permute.xlu0 %720
        %722 = vrot.lane.b32.xlu0 %v604, 64
        %v723 = vpop.permute.xlu0 %722
        %v727 = vsel %vm697, %v717, 0
        %v730 = vsel %vm697, %v719, 0
        %732 = vmatprep.subr.mxu0 0.0
        %733 = vmatpush1.msra.mxu0 %v721
        %734 = vmatprep.subr.mxu0 0.0
        %735 = vmatpush1.msra.mxu0 %v723
        %736 = vmatprep.subr.mxu0 0.0
        %737 = vmatpush1.msra.mxu0 0.0
        %738 = vmatprep.subr.mxu0 0.0
        %739 = vmatpush1.msra.mxu0 0.0
        %740 = vmatprep.subr.mxu0 0.0
        %741 = vmatpush1.msra.mxu0 0.0
        %742 = vmatprep.subr.mxu0 0.0
        %743 = vmatpush1.msra.mxu0 0.0
        %744 = vmatprep.subr.mxu0 0.0
        %745 = vmatpush1.msra.mxu0 0.0
        %746 = vmatprep.subr.mxu0 0.0
        %747 = vmatpush1.msra.mxu0 0.0
        %748 = vmatprep.subr.mxu0 0.0
        %749 = vmatpush1.msra.mxu0 0.0
        %750 = vmatprep.subr.mxu0 0.0
        %751 = vmatpush1.msra.mxu0 0.0
        %752 = vmatprep.subr.mxu0 0.0
        %753 = vmatpush1.msra.mxu0 0.0
        %754 = vmatprep.subr.mxu0 0.0
        %755 = vmatpush1.msra.mxu0 0.0
        %756 = vmatprep.subr.mxu0 0.0
        %757 = vmatpush1.msra.mxu0 0.0
        %758 = vmatprep.subr.mxu0 0.0
        %759 = vmatpush1.msra.mxu0 0.0
        %760 = vmatprep.subr.mxu0 0.0
        %761 = vmatpush1.msra.mxu0 0.0
        %762 = vmatprep.subr.mxu0 0.0
        %763 = vmatpush1.msra.mxu0 0.0
        %764 = vmatprep.subr.mxu0 0.0
        %765 = vmatpush1.msra.mxu0 0.0
        %766 = vmatprep.subr.mxu0 0.0
        %767 = vmatpush1.msra.mxu0 0.0
        %768 = vmatprep.subr.mxu0 0.0
        %769 = vmatpush1.msra.mxu0 0.0
        %770 = vmatprep.subr.mxu0 0.0
        %771 = vmatpush1.msra.mxu0 0.0
        %772 = vmatprep.subr.mxu0 0.0
        %773 = vmatpush1.msra.mxu0 0.0
        %774 = vmatprep.subr.mxu0 0.0
        %775 = vmatpush1.msra.mxu0 0.0
        %776 = vmatprep.subr.mxu0 0.0
        %777 = vmatpush1.msra.mxu0 0.0
        %778 = vmatprep.subr.mxu0 0.0
        %779 = vmatpush1.msra.mxu0 0.0
        %780 = vmatprep.subr.mxu0 0.0
        %781 = vmatpush1.msra.mxu0 0.0
        %782 = vmatprep.subr.mxu0 0.0
        %783 = vmatpush1.msra.mxu0 0.0
        %784 = vmatprep.subr.mxu0 0.0
        %785 = vmatpush1.msra.mxu0 0.0
        %786 = vmatprep.subr.mxu0 0.0
        %787 = vmatpush1.msra.mxu0 0.0
        %788 = vmatprep.subr.mxu0 0.0
        %789 = vmatpush1.msra.mxu0 0.0
        %790 = vmatprep.subr.mxu0 0.0
        %791 = vmatpush1.msra.mxu0 0.0
        %792 = vmatprep.subr.mxu0 0.0
        %793 = vmatpush1.msra.mxu0 0.0
        %794 = vmatprep.subr.mxu0 0.0
        %795 = vmatpush1.msra.mxu0 0.0
        %796 = vmatprep.mubr.f32.mxu0 0.0
        %797 = vmatmul.mubr.f32.gmra.mrb[0].mxu0 %v727
        %v798 = vpop.f32.mrb[0].mxu0
        %v799 = vadd.f32 0.0, %v798
        %v800 = vpop.f32.mrb[0].mxu0
        %801 = vmatprep.mubr.f32.mxu0 0.0
        %802 = vmatmul.mubr.f32.gmra.mrb[0].mxu0 %v730
        %v803 = vpop.f32.mrb[0].mxu0
        %v804 = vadd.f32 0.0, %v803
        %v805 = vpop.f32.mrb[0].mxu0
        %806 = vdwg.mxu0
        %807 = vrot.lane.b32.xlu0 %v601, 120
        %v808 = vpop.permute.xlu0 %807
        %809 = vrot.lane.b32.xlu0 %v604, 120
        %v810 = vpop.permute.xlu0 %809
        %811 = vrot.lane.b32.xlu0 %v601, 88
        %v812 = vpop.permute.xlu0 %811
        %813 = vrot.lane.b32.xlu0 %v604, 88
        %v814 = vpop.permute.xlu0 %813
        %v815 = vsel %vm613, %v808, 0
        %v817 = vsel %vm613, %v810, 0
        %v819 = vsel %vm613, %v812, 0
        %v821 = vsel %vm613, %v814, 0
        %823 = vmatprep.subr.mxu0 0.0
        %824 = vmatpush1.xpose.msra.mxu0 %v819
        %825 = vmatprep.subr.mxu0 0.0
        %826 = vmatpush1.xpose.msra.mxu0 %v821
        %827 = vmatprep.subr.mxu0 0.0
        %828 = vmatpush1.xpose.msra.mxu0 0.0
        %829 = vmatprep.subr.mxu0 0.0
        %830 = vmatpush1.xpose.msra.mxu0 0.0
        %831 = vmatprep.subr.mxu0 0.0
        %832 = vmatpush1.xpose.msra.mxu0 0.0
        %833 = vmatprep.subr.mxu0 0.0
        %834 = vmatpush1.xpose.msra.mxu0 0.0
        %835 = vmatprep.subr.mxu0 0.0
        %836 = vmatpush1.xpose.msra.mxu0 0.0
        %837 = vmatprep.subr.mxu0 0.0
        %838 = vmatpush1.xpose.msra.mxu0 0.0
        %839 = vmatprep.subr.mxu0 0.0
        %840 = vmatpush1.xpose.msra.mxu0 0.0
        %841 = vmatprep.subr.mxu0 0.0
        %842 = vmatpush1.xpose.msra.mxu0 0.0
        %843 = vmatprep.subr.mxu0 0.0
        %844 = vmatpush1.xpose.msra.mxu0 0.0
        %845 = vmatprep.subr.mxu0 0.0
        %846 = vmatpush1.xpose.msra.mxu0 0.0
        %847 = vmatprep.subr.mxu0 0.0
        %848 = vmatpush1.xpose.msra.mxu0 0.0
        %849 = vmatprep.subr.mxu0 0.0
        %850 = vmatpush1.xpose.msra.mxu0 0.0
        %851 = vmatprep.subr.mxu0 0.0
        %852 = vmatpush1.xpose.msra.mxu0 0.0
        %853 = vmatprep.subr.mxu0 0.0
        %854 = vmatpush1.xpose.msra.mxu0 0.0
        %855 = vmatprep.subr.mxu0 0.0
        %856 = vmatpush1.xpose.msra.mxu0 0.0
        %857 = vmatprep.subr.mxu0 0.0
        %858 = vmatpush1.xpose.msra.mxu0 0.0
        %859 = vmatprep.subr.mxu0 0.0
        %860 = vmatpush1.xpose.msra.mxu0 0.0
        %861 = vmatprep.subr.mxu0 0.0
        %862 = vmatpush1.xpose.msra.mxu0 0.0
        %863 = vmatprep.subr.mxu0 0.0
        %864 = vmatpush1.xpose.msra.mxu0 0.0
        %865 = vmatprep.subr.mxu0 0.0
        %866 = vmatpush1.xpose.msra.mxu0 0.0
        %867 = vmatprep.subr.mxu0 0.0
        %868 = vmatpush1.xpose.msra.mxu0 0.0
        %869 = vmatprep.subr.mxu0 0.0
        %870 = vmatpush1.xpose.msra.mxu0 0.0
        %871 = vmatprep.subr.mxu0 0.0
        %872 = vmatpush1.xpose.msra.mxu0 0.0
        %873 = vmatprep.subr.mxu0 0.0
        %874 = vmatpush1.xpose.msra.mxu0 0.0
        %875 = vmatprep.subr.mxu0 0.0
        %876 = vmatpush1.xpose.msra.mxu0 0.0
        %877 = vmatprep.subr.mxu0 0.0
        %878 = vmatpush1.xpose.msra.mxu0 0.0
        %879 = vmatprep.subr.mxu0 0.0
        %880 = vmatpush1.xpose.msra.mxu0 0.0
        %881 = vmatprep.subr.mxu0 0.0
        %882 = vmatpush1.xpose.msra.mxu0 0.0
        %883 = vmatprep.subr.mxu0 0.0
        %884 = vmatpush1.xpose.msra.mxu0 0.0
        %885 = vmatprep.subr.mxu0 0.0
        %886 = vmatpush1.xpose.msra.mxu0 0.0
        %887 = vmatprep.mubr.f32.mxu0 0.0
        %888 = vmatmul.mubr.f32.gmra.mrb[0].mxu0 %v815
        %v889 = vpop.f32.mrb[0].mxu0
        %v890 = vadd.f32 %v511, %v889
        %v891 = vpop.f32.mrb[0].mxu0
        %892 = vmatprep.mubr.f32.mxu0 0.0
        %893 = vmatmul.mubr.f32.gmra.mrb[0].mxu0 %v817
        %v894 = vpop.f32.mrb[0].mxu0
        %v895 = vadd.f32 %v512, %v894
        %v896 = vpop.f32.mrb[0].mxu0
        %897 = vdwg.mxu0
        %v898 = vsel %vm697, %v890, -inf
        %899 = vmax.xlane.f32.xlu0 %v898
        %v900 = vpop.xlane.xlu0 %899
        %v901 = vsel %vm697, %v895, -inf
        %902 = vmax.xlane.f32.xlu0 %v901
        %v903 = vpop.xlane.xlu0 %902
        %v904 = vsub.f32 %v890, %v900
        %v905 = vsub.f32 %v895, %v903
        %v906 = vmul.f32 %v904, 1.442695
        %v907 = vpow.pop %v906
        %v908 = vmul.f32 %v905, 1.442695
        %v909 = vpow.pop %v908
        %v910 = vsel %vm697, %v907, 0.0
        %911 = vadd.xlane.f32.xlu0 %v910
        %v912 = vpop.xlane.xlu0 %911
        %v913 = vsel %vm697, %v909, 0.0
        %914 = vadd.xlane.f32.xlu0 %v913
        %v915 = vpop.xlane.xlu0 %914
        %v916 = vrcp.pop %v912
        %v917 = vmul.f32 %v907, %v916
        %v918 = vrcp.pop %v915
        %v919 = vmul.f32 %v909, %v918
        %920 = vrot.lane.b32.xlu0 %v601, 56
        %v921 = vpop.permute.xlu0 %920
        %922 = vrot.lane.b32.xlu0 %v604, 56
        %v923 = vpop.permute.xlu0 %922
        %v927 = vsel %vm697, %v917, 0
        %v930 = vsel %vm697, %v919, 0
        %932 = vmatprep.subr.mxu0 0.0
        %933 = vmatpush1.msra.mxu0 %v921
        %934 = vmatprep.subr.mxu0 0.0
        %935 = vmatpush1.msra.mxu0 %v923
        %936 = vmatprep.subr.mxu0 0.0
        %937 = vmatpush1.msra.mxu0 0.0
        %938 = vmatprep.subr.mxu0 0.0
        %939 = vmatpush1.msra.mxu0 0.0
        %940 = vmatprep.subr.mxu0 0.0
        %941 = vmatpush1.msra.mxu0 0.0
        %942 = vmatprep.subr.mxu0 0.0
        %943 = vmatpush1.msra.mxu0 0.0
        %944 = vmatprep.subr.mxu0 0.0
        %945 = vmatpush1.msra.mxu0 0.0
        %946 = vmatprep.subr.mxu0 0.0
        %947 = vmatpush1.msra.mxu0 0.0
        %948 = vmatprep.subr.mxu0 0.0
        %949 = vmatpush1.msra.mxu0 0.0
        %950 = vmatprep.subr.mxu0 0.0
        %951 = vmatpush1.msra.mxu0 0.0
        %952 = vmatprep.subr.mxu0 0.0
        %953 = vmatpush1.msra.mxu0 0.0
        %954 = vmatprep.subr.mxu0 0.0
        %955 = vmatpush1.msra.mxu0 0.0
        %956 = vmatprep.subr.mxu0 0.0
        %957 = vmatpush1.msra.mxu0 0.0
        %958 = vmatprep.subr.mxu0 0.0
        %959 = vmatpush1.msra.mxu0 0.0
        %960 = vmatprep.subr.mxu0 0.0
        %961 = vmatpush1.msra.mxu0 0.0
        %962 = vmatprep.subr.mxu0 0.0
        %963 = vmatpush1.msra.mxu0 0.0
        %964 = vmatprep.subr.mxu0 0.0
        %965 = vmatpush1.msra.mxu0 0.0
        %966 = vmatprep.subr.mxu0 0.0
        %967 = vmatpush1.msra.mxu0 0.0
        %968 = vmatprep.subr.mxu0 0.0
        %969 = vmatpush1.msra.mxu0 0.0
        %970 = vmatprep.subr.mxu0 0.0
        %971 = vmatpush1.msra.mxu0 0.0
        %972 = vmatprep.subr.mxu0 0.0
        %973 = vmatpush1.msra.mxu0 0.0
        %974 = vmatprep.subr.mxu0 0.0
        %975 = vmatpush1.msra.mxu0 0.0
        %976 = vmatprep.subr.mxu0 0.0
        %977 = vmatpush1.msra.mxu0 0.0
        %978 = vmatprep.subr.mxu0 0.0
        %979 = vmatpush1.msra.mxu0 0.0
        %980 = vmatprep.subr.mxu0 0.0
        %981 = vmatpush1.msra.mxu0 0.0
        %982 = vmatprep.subr.mxu0 0.0
        %983 = vmatpush1.msra.mxu0 0.0
        %984 = vmatprep.subr.mxu0 0.0
        %985 = vmatpush1.msra.mxu0 0.0
        %986 = vmatprep.subr.mxu0 0.0
        %987 = vmatpush1.msra.mxu0 0.0
        %988 = vmatprep.subr.mxu0 0.0
        %989 = vmatpush1.msra.mxu0 0.0
        %990 = vmatprep.subr.mxu0 0.0
        %991 = vmatpush1.msra.mxu0 0.0
        %992 = vmatprep.subr.mxu0 0.0
        %993 = vmatpush1.msra.mxu0 0.0
        %994 = vmatprep.subr.mxu0 0.0
        %995 = vmatpush1.msra.mxu0 0.0
        %996 = vmatprep.mubr.f32.mxu0 0.0
        %997 = vmatmul.mubr.f32.gmra.mrb[0].mxu0 %v927
        %v998 = vpop.f32.mrb[0].mxu0
        %v999 = vadd.f32 0.0, %v998
        %v1000 = vpop.f32.mrb[0].mxu0
        %1001 = vmatprep.mubr.f32.mxu0 0.0
        %1002 = vmatmul.mubr.f32.gmra.mrb[0].mxu0 %v930
        %v1003 = vpop.f32.mrb[0].mxu0
        %v1004 = vadd.f32 0.0, %v1003
        %v1005 = vpop.f32.mrb[0].mxu0
        %1006 = vdwg.mxu0
        %1007 = vrot.lane.b32.xlu0 %v601, 112
        %v1008 = vpop.permute.xlu0 %1007
        %1009 = vrot.lane.b32.xlu0 %v604, 112
        %v1010 = vpop.permute.xlu0 %1009
        %1011 = vrot.lane.b32.xlu0 %v601, 80
        %v1012 = vpop.permute.xlu0 %1011
        %1013 = vrot.lane.b32.xlu0 %v604, 80
        %v1014 = vpop.permute.xlu0 %1013
        %v1015 = vsel %vm613, %v1008, 0
        %v1017 = vsel %vm613, %v1010, 0
        %v1019 = vsel %vm613, %v1012, 0
        %v1021 = vsel %vm613, %v1014, 0
        %1023 = vmatprep.subr.mxu0 0.0
        %1024 = vmatpush1.xpose.msra.mxu0 %v1019
        %1025 = vmatprep.subr.mxu0 0.0
        %1026 = vmatpush1.xpose.msra.mxu0 %v1021
        %1027 = vmatprep.subr.mxu0 0.0
        %1028 = vmatpush1.xpose.msra.mxu0 0.0
        %1029 = vmatprep.subr.mxu0 0.0
        %1030 = vmatpush1.xpose.msra.mxu0 0.0
        %1031 = vmatprep.subr.mxu0 0.0
        %1032 = vmatpush1.xpose.msra.mxu0 0.0
        %1033 = vmatprep.subr.mxu0 0.0
        %1034 = vmatpush1.xpose.msra.mxu0 0.0
        %1035 = vmatprep.subr.mxu0 0.0
        %1036 = vmatpush1.xpose.msra.mxu0 0.0
        %1037 = vmatprep.subr.mxu0 0.0
        %1038 = vmatpush1.xpose.msra.mxu0 0.0
        %1039 = vmatprep.subr.mxu0 0.0
        %1040 = vmatpush1.xpose.msra.mxu0 0.0
        %1041 = vmatprep.subr.mxu0 0.0
        %1042 = vmatpush1.xpose.msra.mxu0 0.0
        %1043 = vmatprep.subr.mxu0 0.0
        %1044 = vmatpush1.xpose.msra.mxu0 0.0
        %1045 = vmatprep.subr.mxu0 0.0
        %1046 = vmatpush1.xpose.msra.mxu0 0.0
        %1047 = vmatprep.subr.mxu0 0.0
        %1048 = vmatpush1.xpose.msra.mxu0 0.0
        %1049 = vmatprep.subr.mxu0 0.0
        %1050 = vmatpush1.xpose.msra.mxu0 0.0
        %1051 = vmatprep.subr.mxu0 0.0
        %1052 = vmatpush1.xpose.msra.mxu0 0.0
        %1053 = vmatprep.subr.mxu0 0.0
        %1054 = vmatpush1.xpose.msra.mxu0 0.0
        %1055 = vmatprep.subr.mxu0 0.0
        %1056 = vmatpush1.xpose.msra.mxu0 0.0
        %1057 = vmatprep.subr.mxu0 0.0
        %1058 = vmatpush1.xpose.msra.mxu0 0.0
        %1059 = vmatprep.subr.mxu0 0.0
        %1060 = vmatpush1.xpose.msra.mxu0 0.0
        %1061 = vmatprep.subr.mxu0 0.0
        %1062 = vmatpush1.xpose.msra.mxu0 0.0
        %1063 = vmatprep.subr.mxu0 0.0
        %1064 = vmatpush1.xpose.msra.mxu0 0.0
        %1065 = vmatprep.subr.mxu0 0.0
        %1066 = vmatpush1.xpose.msra.mxu0 0.0
        %1067 = vmatprep.subr.mxu0 0.0
        %1068 = vmatpush1.xpose.msra.mxu0 0.0
        %1069 = vmatprep.subr.mxu0 0.0
        %1070 = vmatpush1.xpose.msra.mxu0 0.0
        %1071 = vmatprep.subr.mxu0 0.0
        %1072 = vmatpush1.xpose.msra.mxu0 0.0
        %1073 = vmatprep.subr.mxu0 0.0
        %1074 = vmatpush1.xpose.msra.mxu0 0.0
        %1075 = vmatprep.subr.mxu0 0.0
        %1076 = vmatpush1.xpose.msra.mxu0 0.0
        %1077 = vmatprep.subr.mxu0 0.0
        %1078 = vmatpush1.xpose.msra.mxu0 0.0
        %1079 = vmatprep.subr.mxu0 0.0
        %1080 = vmatpush1.xpose.msra.mxu0 0.0
        %1081 = vmatprep.subr.mxu0 0.0
        %1082 = vmatpush1.xpose.msra.mxu0 0.0
        %1083 = vmatprep.subr.mxu0 0.0
        %1084 = vmatpush1.xpose.msra.mxu0 0.0
        %1085 = vmatprep.subr.mxu0 0.0
        %1086 = vmatpush1.xpose.msra.mxu0 0.0
        %1087 = vmatprep.mubr.f32.mxu0 0.0
        %1088 = vmatmul.mubr.f32.gmra.mrb[0].mxu0 %v1015
        %v1089 = vpop.f32.mrb[0].mxu0
        %v1090 = vadd.f32 %v511, %v1089
        %v1091 = vpop.f32.mrb[0].mxu0
        %1092 = vmatprep.mubr.f32.mxu0 0.0
        %1093 = vmatmul.mubr.f32.gmra.mrb[0].mxu0 %v1017
        %v1094 = vpop.f32.mrb[0].mxu0
        %v1095 = vadd.f32 %v512, %v1094
        %v1096 = vpop.f32.mrb[0].mxu0
        %1097 = vdwg.mxu0
        %v1098 = vsel %vm697, %v1090, -inf
        %1099 = vmax.xlane.f32.xlu0 %v1098
        %v1100 = vpop.xlane.xlu0 %1099
        %v1101 = vsel %vm697, %v1095, -inf
        %1102 = vmax.xlane.f32.xlu0 %v1101
        %v1103 = vpop.xlane.xlu0 %1102
        %v1104 = vsub.f32 %v1090, %v1100
        %v1105 = vsub.f32 %v1095, %v1103
        %v1106 = vmul.f32 %v1104, 1.442695
        %v1107 = vpow.pop %v1106
        %v1108 = vmul.f32 %v1105, 1.442695
        %v1109 = vpow.pop %v1108
        %v1110 = vsel %vm697, %v1107, 0.0
        %1111 = vadd.xlane.f32.xlu0 %v1110
        %v1112 = vpop.xlane.xlu0 %1111
        %v1113 = vsel %vm697, %v1109, 0.0
        %1114 = vadd.xlane.f32.xlu0 %v1113
        %v1115 = vpop.xlane.xlu0 %1114
        %v1116 = vrcp.pop %v1112
        %v1117 = vmul.f32 %v1107, %v1116
        %v1118 = vrcp.pop %v1115
        %v1119 = vmul.f32 %v1109, %v1118
        %1120 = vrot.lane.b32.xlu0 %v601, 48
        %v1121 = vpop.permute.xlu0 %1120
        %1122 = vrot.lane.b32.xlu0 %v604, 48
        %v1123 = vpop.permute.xlu0 %1122
        %v1127 = vsel %vm697, %v1117, 0
        %v1130 = vsel %vm697, %v1119, 0
        %1132 = vmatprep.subr.mxu0 0.0
        %1133 = vmatpush1.msra.mxu0 %v1121
        %1134 = vmatprep.subr.mxu0 0.0
        %1135 = vmatpush1.msra.mxu0 %v1123
        %1136 = vmatprep.subr.mxu0 0.0
        %1137 = vmatpush1.msra.mxu0 0.0
        %1138 = vmatprep.subr.mxu0 0.0
        %1139 = vmatpush1.msra.mxu0 0.0
        %1140 = vmatprep.subr.mxu0 0.0
        %1141 = vmatpush1.msra.mxu0 0.0
        %1142 = vmatprep.subr.mxu0 0.0
        %1143 = vmatpush1.msra.mxu0 0.0
        %1144 = vmatprep.subr.mxu0 0.0
        %1145 = vmatpush1.msra.mxu0 0.0
        %1146 = vmatprep.subr.mxu0 0.0
        %1147 = vmatpush1.msra.mxu0 0.0
        %1148 = vmatprep.subr.mxu0 0.0
        %1149 = vmatpush1.msra.mxu0 0.0
        %1150 = vmatprep.subr.mxu0 0.0
        %1151 = vmatpush1.msra.mxu0 0.0
        %1152 = vmatprep.subr.mxu0 0.0
        %1153 = vmatpush1.msra.mxu0 0.0
        %1154 = vmatprep.subr.mxu0 0.0
        %1155 = vmatpush1.msra.mxu0 0.0
        %1156 = vmatprep.subr.mxu0 0.0
        %1157 = vmatpush1.msra.mxu0 0.0
        %1158 = vmatprep.subr.mxu0 0.0
        %1159 = vmatpush1.msra.mxu0 0.0
        %1160 = vmatprep.subr.mxu0 0.0
        %1161 = vmatpush1.msra.mxu0 0.0
        %1162 = vmatprep.subr.mxu0 0.0
        %1163 = vmatpush1.msra.mxu0 0.0
        %1164 = vmatprep.subr.mxu0 0.0
        %1165 = vmatpush1.msra.mxu0 0.0
        %1166 = vmatprep.subr.mxu0 0.0
        %1167 = vmatpush1.msra.mxu0 0.0
        %1168 = vmatprep.subr.mxu0 0.0
        %1169 = vmatpush1.msra.mxu0 0.0
        %1170 = vmatprep.subr.mxu0 0.0
        %1171 = vmatpush1.msra.mxu0 0.0
        %1172 = vmatprep.subr.mxu0 0.0
        %1173 = vmatpush1.msra.mxu0 0.0
        %1174 = vmatprep.subr.mxu0 0.0
        %1175 = vmatpush1.msra.mxu0 0.0
        %1176 = vmatprep.subr.mxu0 0.0
        %1177 = vmatpush1.msra.mxu0 0.0
        %1178 = vmatprep.subr.mxu0 0.0
        %1179 = vmatpush1.msra.mxu0 0.0
        %1180 = vmatprep.subr.mxu0 0.0
        %1181 = vmatpush1.msra.mxu0 0.0
        %1182 = vmatprep.subr.mxu0 0.0
        %1183 = vmatpush1.msra.mxu0 0.0
        %1184 = vmatprep.subr.mxu0 0.0
        %1185 = vmatpush1.msra.mxu0 0.0
        %1186 = vmatprep.subr.mxu0 0.0
        %1187 = vmatpush1.msra.mxu0 0.0
        %1188 = vmatprep.subr.mxu0 0.0
        %1189 = vmatpush1.msra.mxu0 0.0
        %1190 = vmatprep.subr.mxu0 0.0
        %1191 = vmatpush1.msra.mxu0 0.0
        %1192 = vmatprep.subr.mxu0 0.0
        %1193 = vmatpush1.msra.mxu0 0.0
        %1194 = vmatprep.subr.mxu0 0.0
        %1195 = vmatpush1.msra.mxu0 0.0
        %1196 = vmatprep.mubr.f32.mxu0 0.0
        %1197 = vmatmul.mubr.f32.gmra.mrb[0].mxu0 %v1127
        %v1198 = vpop.f32.mrb[0].mxu0
        %v1199 = vadd.f32 0.0, %v1198
        %v1200 = vpop.f32.mrb[0].mxu0
        %1201 = vmatprep.mubr.f32.mxu0 0.0
        %1202 = vmatmul.mubr.f32.gmra.mrb[0].mxu0 %v1130
        %v1203 = vpop.f32.mrb[0].mxu0
        %v1204 = vadd.f32 0.0, %v1203
        %v1205 = vpop.f32.mrb[0].mxu0
        %1206 = vdwg.mxu0
        %1207 = vrot.lane.b32.xlu0 %v601, 104
        %v1208 = vpop.permute.xlu0 %1207
        %1209 = vrot.lane.b32.xlu0 %v604, 104
        %v1210 = vpop.permute.xlu0 %1209
        %1211 = vrot.lane.b32.xlu0 %v601, 72
        %v1212 = vpop.permute.xlu0 %1211
        %1213 = vrot.lane.b32.xlu0 %v604, 72
        %v1214 = vpop.permute.xlu0 %1213
        %v1215 = vsel %vm613, %v1208, 0
        %v1217 = vsel %vm613, %v1210, 0
        %v1219 = vsel %vm613, %v1212, 0
        %v1221 = vsel %vm613, %v1214, 0
        %1223 = vmatprep.subr.mxu0 0.0
        %1224 = vmatpush1.xpose.msra.mxu0 %v1219
        %1225 = vmatprep.subr.mxu0 0.0
        %1226 = vmatpush1.xpose.msra.mxu0 %v1221
        %1227 = vmatprep.subr.mxu0 0.0
        %1228 = vmatpush1.xpose.msra.mxu0 0.0
        %1229 = vmatprep.subr.mxu0 0.0
        %1230 = vmatpush1.xpose.msra.mxu0 0.0
        %1231 = vmatprep.subr.mxu0 0.0
        %1232 = vmatpush1.xpose.msra.mxu0 0.0
        %1233 = vmatprep.subr.mxu0 0.0
        %1234 = vmatpush1.xpose.msra.mxu0 0.0
        %1235 = vmatprep.subr.mxu0 0.0
        %1236 = vmatpush1.xpose.msra.mxu0 0.0
        %1237 = vmatprep.subr.mxu0 0.0
        %1238 = vmatpush1.xpose.msra.mxu0 0.0
        %1239 = vmatprep.subr.mxu0 0.0
        %1240 = vmatpush1.xpose.msra.mxu0 0.0
        %1241 = vmatprep.subr.mxu0 0.0
        %1242 = vmatpush1.xpose.msra.mxu0 0.0
        %1243 = vmatprep.subr.mxu0 0.0
        %1244 = vmatpush1.xpose.msra.mxu0 0.0
        %1245 = vmatprep.subr.mxu0 0.0
        %1246 = vmatpush1.xpose.msra.mxu0 0.0
        %1247 = vmatprep.subr.mxu0 0.0
        %1248 = vmatpush1.xpose.msra.mxu0 0.0
        %1249 = vmatprep.subr.mxu0 0.0
        %1250 = vmatpush1.xpose.msra.mxu0 0.0
        %1251 = vmatprep.subr.mxu0 0.0
        %1252 = vmatpush1.xpose.msra.mxu0 0.0
        %1253 = vmatprep.subr.mxu0 0.0
        %1254 = vmatpush1.xpose.msra.mxu0 0.0
        %1255 = vmatprep.subr.mxu0 0.0
        %1256 = vmatpush1.xpose.msra.mxu0 0.0
        %1257 = vmatprep.subr.mxu0 0.0
        %1258 = vmatpush1.xpose.msra.mxu0 0.0
        %1259 = vmatprep.subr.mxu0 0.0
        %1260 = vmatpush1.xpose.msra.mxu0 0.0
        %1261 = vmatprep.subr.mxu0 0.0
        %1262 = vmatpush1.xpose.msra.mxu0 0.0
        %1263 = vmatprep.subr.mxu0 0.0
        %1264 = vmatpush1.xpose.msra.mxu0 0.0
        %1265 = vmatprep.subr.mxu0 0.0
        %1266 = vmatpush1.xpose.msra.mxu0 0.0
        %1267 = vmatprep.subr.mxu0 0.0
        %1268 = vmatpush1.xpose.msra.mxu0 0.0
        %1269 = vmatprep.subr.mxu0 0.0
        %1270 = vmatpush1.xpose.msra.mxu0 0.0
        %1271 = vmatprep.subr.mxu0 0.0
        %1272 = vmatpush1.xpose.msra.mxu0 0.0
        %1273 = vmatprep.subr.mxu0 0.0
        %1274 = vmatpush1.xpose.msra.mxu0 0.0
        %1275 = vmatprep.subr.mxu0 0.0
        %1276 = vmatpush1.xpose.msra.mxu0 0.0
        %1277 = vmatprep.subr.mxu0 0.0
        %1278 = vmatpush1.xpose.msra.mxu0 0.0
        %1279 = vmatprep.subr.mxu0 0.0
        %1280 = vmatpush1.xpose.msra.mxu0 0.0
        %1281 = vmatprep.subr.mxu0 0.0
        %1282 = vmatpush1.xpose.msra.mxu0 0.0
        %1283 = vmatprep.subr.mxu0 0.0
        %1284 = vmatpush1.xpose.msra.mxu0 0.0
        %1285 = vmatprep.subr.mxu0 0.0
        %1286 = vmatpush1.xpose.msra.mxu0 0.0
        %1287 = vmatprep.mubr.f32.mxu0 0.0
        %1288 = vmatmul.mubr.f32.gmra.mrb[0].mxu0 %v1215
        %v1289 = vpop.f32.mrb[0].mxu0
        %v1290 = vadd.f32 %v511, %v1289
        %v1291 = vpop.f32.mrb[0].mxu0
        %1292 = vmatprep.mubr.f32.mxu0 0.0
        %1293 = vmatmul.mubr.f32.gmra.mrb[0].mxu0 %v1217
        %v1294 = vpop.f32.mrb[0].mxu0
        %v1295 = vadd.f32 %v512, %v1294
        %v1296 = vpop.f32.mrb[0].mxu0
        %1297 = vdwg.mxu0
        %v1298 = vsel %vm697, %v1290, -inf
        %1299 = vmax.xlane.f32.xlu0 %v1298
        %v1300 = vpop.xlane.xlu0 %1299
        %v1301 = vsel %vm697, %v1295, -inf
        %1302 = vmax.xlane.f32.xlu0 %v1301
        %v1303 = vpop.xlane.xlu0 %1302
        %v1304 = vsub.f32 %v1290, %v1300
        %v1305 = vsub.f32 %v1295, %v1303
        %v1306 = vmul.f32 %v1304, 1.442695
        %v1307 = vpow.pop %v1306
        %v1308 = vmul.f32 %v1305, 1.442695
        %v1309 = vpow.pop %v1308
        %v1310 = vsel %vm697, %v1307, 0.0
        %1311 = vadd.xlane.f32.xlu0 %v1310
        %v1312 = vpop.xlane.xlu0 %1311
        %v1313 = vsel %vm697, %v1309, 0.0
        %1314 = vadd.xlane.f32.xlu0 %v1313
        %v1315 = vpop.xlane.xlu0 %1314
        %v1316 = vrcp.pop %v1312
        %v1317 = vmul.f32 %v1307, %v1316
        %v1318 = vrcp.pop %v1315
        %v1319 = vmul.f32 %v1309, %v1318
        %1320 = vrot.lane.b32.xlu0 %v601, 40
        %v1321 = vpop.permute.xlu0 %1320
        %1322 = vrot.lane.b32.xlu0 %v604, 40
        %v1323 = vpop.permute.xlu0 %1322
        %v1327 = vsel %vm697, %v1317, 0
        %v1330 = vsel %vm697, %v1319, 0
        %1332 = vmatprep.subr.mxu0 0.0
        %1333 = vmatpush1.msra.mxu0 %v1321
        %1334 = vmatprep.subr.mxu0 0.0
        %1335 = vmatpush1.msra.mxu0 %v1323
        %1336 = vmatprep.subr.mxu0 0.0
        %1337 = vmatpush1.msra.mxu0 0.0
        %1338 = vmatprep.subr.mxu0 0.0
        %1339 = vmatpush1.msra.mxu0 0.0
        %1340 = vmatprep.subr.mxu0 0.0
        %1341 = vmatpush1.msra.mxu0 0.0
        %1342 = vmatprep.subr.mxu0 0.0
        %1343 = vmatpush1.msra.mxu0 0.0
        %1344 = vmatprep.subr.mxu0 0.0
        %1345 = vmatpush1.msra.mxu0 0.0
        %1346 = vmatprep.subr.mxu0 0.0
        %1347 = vmatpush1.msra.mxu0 0.0
        %1348 = vmatprep.subr.mxu0 0.0
        %1349 = vmatpush1.msra.mxu0 0.0
        %1350 = vmatprep.subr.mxu0 0.0
        %1351 = vmatpush1.msra.mxu0 0.0
        %1352 = vmatprep.subr.mxu0 0.0
        %1353 = vmatpush1.msra.mxu0 0.0
        %1354 = vmatprep.subr.mxu0 0.0
        %1355 = vmatpush1.msra.mxu0 0.0
        %1356 = vmatprep.subr.mxu0 0.0
        %1357 = vmatpush1.msra.mxu0 0.0
        %1358 = vmatprep.subr.mxu0 0.0
        %1359 = vmatpush1.msra.mxu0 0.0
        %1360 = vmatprep.subr.mxu0 0.0
        %1361 = vmatpush1.msra.mxu0 0.0
        %1362 = vmatprep.subr.mxu0 0.0
        %1363 = vmatpush1.msra.mxu0 0.0
        %1364 = vmatprep.subr.mxu0 0.0
        %1365 = vmatpush1.msra.mxu0 0.0
        %1366 = vmatprep.subr.mxu0 0.0
        %1367 = vmatpush1.msra.mxu0 0.0
        %1368 = vmatprep.subr.mxu0 0.0
        %1369 = vmatpush1.msra.mxu0 0.0
        %1370 = vmatprep.subr.mxu0 0.0
        %1371 = vmatpush1.msra.mxu0 0.0
        %1372 = vmatprep.subr.mxu0 0.0
        %1373 = vmatpush1.msra.mxu0 0.0
        %1374 = vmatprep.subr.mxu0 0.0
        %1375 = vmatpush1.msra.mxu0 0.0
        %1376 = vmatprep.subr.mxu0 0.0
        %1377 = vmatpush1.msra.mxu0 0.0
        %1378 = vmatprep.subr.mxu0 0.0
        %1379 = vmatpush1.msra.mxu0 0.0
        %1380 = vmatprep.subr.mxu0 0.0
        %1381 = vmatpush1.msra.mxu0 0.0
        %1382 = vmatprep.subr.mxu0 0.0
        %1383 = vmatpush1.msra.mxu0 0.0
        %1384 = vmatprep.subr.mxu0 0.0
        %1385 = vmatpush1.msra.mxu0 0.0
        %1386 = vmatprep.subr.mxu0 0.0
        %1387 = vmatpush1.msra.mxu0 0.0
        %1388 = vmatprep.subr.mxu0 0.0
        %1389 = vmatpush1.msra.mxu0 0.0
        %1390 = vmatprep.subr.mxu0 0.0
        %1391 = vmatpush1.msra.mxu0 0.0
        %1392 = vmatprep.subr.mxu0 0.0
        %1393 = vmatpush1.msra.mxu0 0.0
        %1394 = vmatprep.subr.mxu0 0.0
        %1395 = vmatpush1.msra.mxu0 0.0
        %1396 = vmatprep.mubr.f32.mxu0 0.0
        %1397 = vmatmul.mubr.f32.gmra.mrb[0].mxu0 %v1327
        %v1398 = vpop.f32.mrb[0].mxu0
        %v1399 = vadd.f32 0.0, %v1398
        %v1400 = vpop.f32.mrb[0].mxu0
        %1401 = vmatprep.mubr.f32.mxu0 0.0
        %1402 = vmatmul.mubr.f32.gmra.mrb[0].mxu0 %v1330
        %v1403 = vpop.f32.mrb[0].mxu0
        %v1404 = vadd.f32 0.0, %v1403
        %v1405 = vpop.f32.mrb[0].mxu0
        %1406 = vdwg.mxu0
        %1409 = vrot.lane.b32.xlu0 %v999, 8
        %v1410 = vpop.permute.xlu0 %1409
        %1411 = vrot.lane.b32.xlu0 %v1004, 8
        %v1412 = vpop.permute.xlu0 %1411
        %1417 = vrot.lane.b32.xlu0 %v1199, 16
        %v1418 = vpop.permute.xlu0 %1417
        %1419 = vrot.lane.b32.xlu0 %v1204, 16
        %v1420 = vpop.permute.xlu0 %1419
        %1425 = vrot.lane.b32.xlu0 %v1399, 24
        %v1426 = vpop.permute.xlu0 %1425
        %1427 = vrot.lane.b32.xlu0 %v1404, 24
        %v1428 = vpop.permute.xlu0 %1427
        %v1431 = vsel %vm613, %v799, %v1410
        %v1432 = vsel %vm613, %v804, %v1412
        %v1433 = vsel %vm697, %v1431, %v1418
        %v1434 = vsel %vm697, %v1432, %v1420
        %vm1435 = vcmask 195584
        %v1436 = vsel %vm1435, %v1433, %v1426
        %v1437 = vsel %vm1435, %v1434, %v1428
        %v1438 = vpack.c.bf16 %v1437, %v1436
        %v1439 = vlaneseq
        %v1440 = vshrl.u32 %v1439, 7
        %v1441 = vsub.s32 0, %v1440
        %v1442 = vrot.slane %v490, %v1441
        %v1447 = vunpack.c.l.b16 %v507
        %v1448 = vunpack.c.l.b16 %v508
        %v1449 = vunpack.c.l.b16 %v509
        %v1450 = vunpack.c.l.b16 %v510
        %v1451 = vpack.c.b16 %v1448, %v1447
        %v1452 = vpack.c.b16 %v1450, %v1449
        %vm1455 = vcmask 261120
        %v1457 = vsel %vm1455, %v1438, 0
        %1459 = vmatprep.subr.bf16.mxu0 0
        %1460 = vmatpush1.bf16.msra.mxu0 %v1451
        %1461 = vmatprep.subr.bf16.mxu0 0
        %1462 = vmatpush1.bf16.msra.mxu0 %v1452
        %1463 = vmatprep.subr.bf16.mxu0 0
        %1464 = vmatpush1.bf16.msra.mxu0 0
        %1465 = vmatprep.subr.bf16.mxu0 0
        %1466 = vmatpush1.bf16.msra.mxu0 0
        %1467 = vmatprep.subr.bf16.mxu0 0
        %1468 = vmatpush1.bf16.msra.mxu0 0
        %1469 = vmatprep.subr.bf16.mxu0 0
        %1470 = vmatpush1.bf16.msra.mxu0 0
        %1471 = vmatprep.subr.bf16.mxu0 0
        %1472 = vmatpush1.bf16.msra.mxu0 0
        %1473 = vmatprep.subr.bf16.mxu0 0
        %1474 = vmatpush1.bf16.msra.mxu0 0
        %1475 = vmatprep.subr.bf16.mxu0 0
        %1476 = vmatpush1.bf16.msra.mxu0 0
        %1477 = vmatprep.subr.bf16.mxu0 0
        %1478 = vmatpush1.bf16.msra.mxu0 0
        %1479 = vmatprep.subr.bf16.mxu0 0
        %1480 = vmatpush1.bf16.msra.mxu0 0
        %1481 = vmatprep.subr.bf16.mxu0 0
        %1482 = vmatpush1.bf16.msra.mxu0 0
        %1483 = vmatprep.subr.bf16.mxu0 0
        %1484 = vmatpush1.bf16.msra.mxu0 0
        %1485 = vmatprep.subr.bf16.mxu0 0
        %1486 = vmatpush1.bf16.msra.mxu0 0
        %1487 = vmatprep.subr.bf16.mxu0 0
        %1488 = vmatpush1.bf16.msra.mxu0 0
        %1489 = vmatprep.subr.bf16.mxu0 0
        %1490 = vmatpush1.bf16.msra.mxu0 0
        %1491 = vmatprep.mubr.bf16.mxu0 0
        %1492 = vmatmul.mubr.bf16.gmra.mrb[0].mxu0 %v1457
        %v1493 = vpop.f32.mrb[0].mxu0
        %v1494 = vadd.f32 %v1442, %v1493
        %v1495 = vpop.f32.mrb[0].mxu0
        %v1496 = vpop.f32.mrb[0].mxu0
        %v1497 = vadd.f32 %v1442, %v1496
        %v1498 = vpop.f32.mrb[0].mxu0
        %1499 = vdwg.mxu0
        %v1500 = vadd.f32 %v488, %v1494
        %v1501 = vadd.f32 %v489, %v1497
        %1502 = vadd.xlane.f32.xlu0 %v1500
        %v1503 = vpop.xlane.xlu0 %1502
        %1504 = vadd.xlane.f32.xlu0 %v1501
        %v1505 = vpop.xlane.xlu0 %1504
        %v1506 = vmul.f32 %v1503, 0.03125
        %v1507 = vmul.f32 %v1505, 0.03125
        %v1508 = vsub.f32 %v1500, %v1506
        %v1509 = vsub.f32 %v1501, %v1507
        %v1510 = vmul.f32 %v1508, %v442
        %v1511 = vmul.f32 %v1509, %v442
        %v1512 = vmul.f32 %v1510, %v1510
        %v1513 = vmul.f32 %v1511, %v1511
        %1514 = vadd.xlane.f32.xlu0 %v1512
        %v1515 = vpop.xlane.xlu0 %1514
        %1516 = vadd.xlane.f32.xlu0 %v1513
        %v1517 = vpop.xlane.xlu0 %1516
        %v1518 = vmul.f32 %v1515, 0.03125
        %v1519 = vmul.f32 %v1517, 0.03125
        %v1520 = vadd.f32 %v1518, 1e-12
        %v1521 = vadd.f32 %v1519, 1e-12
        %v1522 = vrsqrt.pop %v1520
        %v1523 = vrsqrt.pop %v1521
        %v1524 = vmul.f32 %v1510, %v1522
        %v1525 = vmul.f32 %v1511, %v1523
        %v1526 = vlaneseq
        %v1527 = vshrl.u32 %v1526, 7
        %v1528 = vsub.s32 1, %v1527
        %v1529 = vrot.slane %v490, %v1528
        %v1530 = vmul.f32 %v1524, %v1529
        %v1531 = vmul.f32 %v1525, %v1529
        %v1532 = vlaneseq
        %v1533 = vshrl.u32 %v1532, 7
        %v1534 = vsub.s32 2, %v1533
        %v1535 = vrot.slane %v490, %v1534
        %v1536 = vadd.f32 %v1530, %v1535
        %v1537 = vadd.f32 %v1531, %v1535
        %v1538 = vld [vmem:[%s431] sm:$0xf]
        %v1539 = vld [vmem:[%s431 + $0x4] sm:$0xf]
        %v1540 = vld [vmem:[%s431 + $0x8] sm:$0xf]
        %v1541 = vld [vmem:[%s431 + $0xc] sm:$0xf]
        %v1542 = vld [vmem:[%s431 + $0x10] sm:$0xf]
        %v1543 = vld [vmem:[%s431 + $0x14] sm:$0xf]
        %v1544 = vld [vmem:[%s431 + $0x18] sm:$0xf]
        %v1545 = vld [vmem:[%s431 + $0x1c] sm:$0xf]
        %v1546 = vld [vmem:[%s431 + $0x20] sm:$0xf]
        %v1547 = vld [vmem:[%s431 + $0x24] sm:$0xf]
        %v1548 = vld [vmem:[%s431 + $0x28] sm:$0xf]
        %v1549 = vld [vmem:[%s431 + $0x2c] sm:$0xf]
        %v1550 = vld [vmem:[%s431 + $0x30] sm:$0xf]
        %v1551 = vld [vmem:[%s431 + $0x34] sm:$0xf]
        %v1552 = vld [vmem:[%s431 + $0x38] sm:$0xf]
        %v1553 = vld [vmem:[%s431 + $0x3c] sm:$0xf]
        %v1554 = vld [vmem:[%s436] sm:$0xf]
        %v1555 = vld [vmem:[%s436 + $0x4] sm:$0xf]
        %v1556 = vld [vmem:[%s436 + $0x8] sm:$0xf]
        %v1557 = vld [vmem:[%s436 + $0xc] sm:$0xf]
        %v1558 = vld [vmem:[%s436 + $0x10] sm:$0xf]
        %v1559 = vld [vmem:[%s436 + $0x14] sm:$0xf]
        %v1560 = vld [vmem:[%s436 + $0x18] sm:$0xf]
        %v1561 = vld [vmem:[%s436 + $0x1c] sm:$0xf]
        %v1562 = vld [vmem:[%s436 + $0x20] sm:$0xf]
        %v1563 = vld [vmem:[%s436 + $0x24] sm:$0xf]
        %v1564 = vld [vmem:[%s436 + $0x28] sm:$0xf]
        %v1565 = vld [vmem:[%s436 + $0x2c] sm:$0xf]
        %v1566 = vld [vmem:[%s436 + $0x30] sm:$0xf]
        %v1567 = vld [vmem:[%s436 + $0x34] sm:$0xf]
        %v1568 = vld [vmem:[%s436 + $0x38] sm:$0xf]
        %v1569 = vld [vmem:[%s436 + $0x3c] sm:$0xf]
        %v1570 = vpack.c.bf16 %v1537, %v1536
        %v1571 = vlaneseq
        %v1572 = vshrl.u32 %v1571, 7
        %v1573 = vsub.s32 3, %v1572
        %v1574 = vrot.slane %v490, %v1573
        %v1591 = vunpack.c.l.b16 %v1538
        %v1592 = vunpack.c.l.b16 %v1539
        %v1593 = vunpack.c.l.b16 %v1540
        %v1594 = vunpack.c.l.b16 %v1541
        %v1595 = vunpack.c.l.b16 %v1542
        %v1596 = vunpack.c.l.b16 %v1543
        %v1597 = vunpack.c.l.b16 %v1544
        %v1598 = vunpack.c.l.b16 %v1545
        %v1599 = vunpack.c.l.b16 %v1546
        %v1600 = vunpack.c.l.b16 %v1547
        %v1601 = vunpack.c.l.b16 %v1548
        %v1602 = vunpack.c.l.b16 %v1549
        %v1603 = vunpack.c.l.b16 %v1550
        %v1604 = vunpack.c.l.b16 %v1551
        %v1605 = vunpack.c.l.b16 %v1552
        %v1606 = vunpack.c.l.b16 %v1553
        %v1607 = vpack.c.b16 %v1592, %v1591
        %v1608 = vpack.c.b16 %v1594, %v1593
        %v1609 = vpack.c.b16 %v1596, %v1595
        %v1610 = vpack.c.b16 %v1598, %v1597
        %v1611 = vpack.c.b16 %v1600, %v1599
        %v1612 = vpack.c.b16 %v1602, %v1601
        %v1613 = vpack.c.b16 %v1604, %v1603
        %v1614 = vpack.c.b16 %v1606, %v1605
        %1623 = vmatprep.subr.bf16.mxu0 0
        %1624 = vmatpush1.bf16.msra.mxu0 %v1607
        %1625 = vmatprep.subr.bf16.mxu0 0
        %1626 = vmatpush1.bf16.msra.mxu0 %v1608
        %1627 = vmatprep.subr.bf16.mxu0 0
        %1628 = vmatpush1.bf16.msra.mxu0 %v1609
        %1629 = vmatprep.subr.bf16.mxu0 0
        %1630 = vmatpush1.bf16.msra.mxu0 %v1610
        %1631 = vmatprep.subr.bf16.mxu0 0
        %1632 = vmatpush1.bf16.msra.mxu0 %v1611
        %1633 = vmatprep.subr.bf16.mxu0 0
        %1634 = vmatpush1.bf16.msra.mxu0 %v1612
        %1635 = vmatprep.subr.bf16.mxu0 0
        %1636 = vmatpush1.bf16.msra.mxu0 %v1613
        %1637 = vmatprep.subr.bf16.mxu0 0
        %1638 = vmatpush1.bf16.msra.mxu0 %v1614
        %1639 = vmatprep.subr.bf16.mxu0 0
        %1640 = vmatpush1.bf16.msra.mxu0 0
        %1641 = vmatprep.subr.bf16.mxu0 0
        %1642 = vmatpush1.bf16.msra.mxu0 0
        %1643 = vmatprep.subr.bf16.mxu0 0
        %1644 = vmatpush1.bf16.msra.mxu0 0
        %1645 = vmatprep.subr.bf16.mxu0 0
        %1646 = vmatpush1.bf16.msra.mxu0 0
        %1647 = vmatprep.subr.bf16.mxu0 0
        %1648 = vmatpush1.bf16.msra.mxu0 0
        %1649 = vmatprep.subr.bf16.mxu0 0
        %1650 = vmatpush1.bf16.msra.mxu0 0
        %1651 = vmatprep.subr.bf16.mxu0 0
        %1652 = vmatpush1.bf16.msra.mxu0 0
        %1653 = vmatprep.subr.bf16.mxu0 0
        %1654 = vmatpush1.bf16.msra.mxu0 0
        %1655 = vmatprep.mubr.bf16.mxu0 0
        %1656 = vmatmul.mubr.bf16.gmra.mrb[0].mxu0 %v1570
        %v1657 = vpop.f32.mrb[0].mxu0
        %v1658 = vadd.f32 %v1574, %v1657
        %v1659 = vpop.f32.mrb[0].mxu0
        %v1660 = vpop.f32.mrb[0].mxu0
        %v1661 = vadd.f32 %v1574, %v1660
        %v1662 = vpop.f32.mrb[0].mxu0
        %1663 = vdwg.mxu0
        %v1664 = vmul.f32 %v1658, 0.5
        %v1665 = vmul.f32 %v1661, 0.5
        %v1666 = vmul.f32 %v1658, 0.70710677
        %v1667 = vmul.f32 %v1661, 0.70710677
        %v1668 = verf.f32.pop %v1666
        %v1669 = verf.f32.pop %v1667
        %v1670 = vadd.f32 %v1668, 1.0
        %v1671 = vadd.f32 %v1669, 1.0
        %v1672 = vmul.f32 %v1664, %v1670
        %v1673 = vmul.f32 %v1665, %v1671
        %v1674 = vpack.c.bf16 %v1673, %v1672
        %v1675 = vlaneseq
        %v1676 = vshrl.u32 %v1675, 7
        %v1677 = vsub.s32 4, %v1676
        %v1678 = vrot.slane %v490, %v1677
        %v1695 = vunpack.c.l.b16 %v1554
        %v1696 = vunpack.c.l.b16 %v1555
        %v1697 = vunpack.c.l.b16 %v1556
        %v1698 = vunpack.c.l.b16 %v1557
        %v1699 = vunpack.c.l.b16 %v1558
        %v1700 = vunpack.c.l.b16 %v1559
        %v1701 = vunpack.c.l.b16 %v1560
        %v1702 = vunpack.c.l.b16 %v1561
        %v1703 = vunpack.c.l.b16 %v1562
        %v1704 = vunpack.c.l.b16 %v1563
        %v1705 = vunpack.c.l.b16 %v1564
        %v1706 = vunpack.c.l.b16 %v1565
        %v1707 = vunpack.c.l.b16 %v1566
        %v1708 = vunpack.c.l.b16 %v1567
        %v1709 = vunpack.c.l.b16 %v1568
        %v1710 = vunpack.c.l.b16 %v1569
        %v1711 = vpack.c.b16 %v1696, %v1695
        %v1712 = vpack.c.b16 %v1698, %v1697
        %v1713 = vpack.c.b16 %v1700, %v1699
        %v1714 = vpack.c.b16 %v1702, %v1701
        %v1715 = vpack.c.b16 %v1704, %v1703
        %v1716 = vpack.c.b16 %v1706, %v1705
        %v1717 = vpack.c.b16 %v1708, %v1707
        %v1718 = vpack.c.b16 %v1710, %v1709
        %1727 = vmatprep.subr.bf16.mxu0 0
        %1728 = vmatpush1.bf16.msra.mxu0 %v1711
        %1729 = vmatprep.subr.bf16.mxu0 0
        %1730 = vmatpush1.bf16.msra.mxu0 %v1712
        %1731 = vmatprep.subr.bf16.mxu0 0
        %1732 = vmatpush1.bf16.msra.mxu0 %v1713
        %1733 = vmatprep.subr.bf16.mxu0 0
        %1734 = vmatpush1.bf16.msra.mxu0 %v1714
        %1735 = vmatprep.subr.bf16.mxu0 0
        %1736 = vmatpush1.bf16.msra.mxu0 %v1715
        %1737 = vmatprep.subr.bf16.mxu0 0
        %1738 = vmatpush1.bf16.msra.mxu0 %v1716
        %1739 = vmatprep.subr.bf16.mxu0 0
        %1740 = vmatpush1.bf16.msra.mxu0 %v1717
        %1741 = vmatprep.subr.bf16.mxu0 0
        %1742 = vmatpush1.bf16.msra.mxu0 %v1718
        %1743 = vmatprep.subr.bf16.mxu0 0
        %1744 = vmatpush1.bf16.msra.mxu0 0
        %1745 = vmatprep.subr.bf16.mxu0 0
        %1746 = vmatpush1.bf16.msra.mxu0 0
        %1747 = vmatprep.subr.bf16.mxu0 0
        %1748 = vmatpush1.bf16.msra.mxu0 0
        %1749 = vmatprep.subr.bf16.mxu0 0
        %1750 = vmatpush1.bf16.msra.mxu0 0
        %1751 = vmatprep.subr.bf16.mxu0 0
        %1752 = vmatpush1.bf16.msra.mxu0 0
        %1753 = vmatprep.subr.bf16.mxu0 0
        %1754 = vmatpush1.bf16.msra.mxu0 0
        %1755 = vmatprep.subr.bf16.mxu0 0
        %1756 = vmatpush1.bf16.msra.mxu0 0
        %1757 = vmatprep.subr.bf16.mxu0 0
        %1758 = vmatpush1.bf16.msra.mxu0 0
        %1759 = vmatprep.mubr.bf16.mxu0 0
        %1760 = vmatmul.mubr.bf16.gmra.mrb[0].mxu0 %v1674
        %v1761 = vpop.f32.mrb[0].mxu0
        %v1762 = vadd.f32 %v1678, %v1761
        %v1763 = vpop.f32.mrb[0].mxu0
        %v1764 = vpop.f32.mrb[0].mxu0
        %v1765 = vadd.f32 %v1678, %v1764
        %v1766 = vpop.f32.mrb[0].mxu0
        %1767 = vdwg.mxu0
        %v1768 = vadd.f32 %v1536, %v1762
        %v1769 = vadd.f32 %v1537, %v1765
        %1770 = vadd.xlane.f32.xlu0 %v1768
        %v1771 = vpop.xlane.xlu0 %1770
        %1772 = vadd.xlane.f32.xlu0 %v1769
        %v1773 = vpop.xlane.xlu0 %1772
        %v1774 = vmul.f32 %v1771, 0.03125
        %v1775 = vmul.f32 %v1773, 0.03125
        %v1776 = vsub.f32 %v1768, %v1774
        %v1777 = vsub.f32 %v1769, %v1775
        %v1778 = vmul.f32 %v1776, %v442
        %v1779 = vmul.f32 %v1777, %v442
        %v1780 = vmul.f32 %v1778, %v1778
        %v1781 = vmul.f32 %v1779, %v1779
        %1782 = vadd.xlane.f32.xlu0 %v1780
        %v1783 = vpop.xlane.xlu0 %1782
        %1784 = vadd.xlane.f32.xlu0 %v1781
        %v1785 = vpop.xlane.xlu0 %1784
        %v1786 = vmul.f32 %v1783, 0.03125
        %v1787 = vmul.f32 %v1785, 0.03125
        %v1788 = vadd.f32 %v1786, 1e-12
        %v1789 = vadd.f32 %v1787, 1e-12
        %v1790 = vrsqrt.pop %v1788
        %v1791 = vrsqrt.pop %v1789
        %v1792 = vmul.f32 %v1778, %v1790
        %v1793 = vmul.f32 %v1779, %v1791
        %v1794 = vlaneseq
        %v1795 = vshrl.u32 %v1794, 7
        %v1796 = vsub.s32 5, %v1795
        %v1797 = vrot.slane %v490, %v1796
        %v1798 = vmul.f32 %v1792, %v1797
        %v1799 = vmul.f32 %v1793, %v1797
        %v1800 = vlaneseq
        %v1801 = vshrl.u32 %v1800, 7
        %v1802 = vsub.s32 6, %v1801
        %v1803 = vrot.slane %v490, %v1802
        %v1804 = vadd.f32 %v1798, %v1803
        %v1805 = vadd.f32 %v1799, %v1803
        %1806 = vst [vmem:[#allocation2] sm:$0xff] %v1804
        %1807 = vst [vmem:[#allocation2 + $0x8] sm:$0xff] %v1805
        %p1808 = scmp.eq.s32.totalorder %s31, 1
        // Predicated region
        $region65: #{bert_for_latent_connector_forward.1} parent=51 // pred_check
          %p1809 = pneg %p1808
        $region66: #{bert_for_latent_connector_forward.1} parent=51 // pred_check_branch
          %1811 = sbr.rel (%p1809) target = $region68
        $region67: #{bert_for_latent_connector_forward.1} parent=51 // pred_region
          $region69: #{bert_for_latent_connector_forward.1} parent=67
            #allocation11 [shape = 'u8[65536]{0}', space=vmem, size = 0x10000, scoped, tag = 'scoped memory for bert_for_latent_connector_forward.1']
            $region70: #{bert_for_latent_connector_forward.1} parent=69
              #allocation12 [shape = 's32[1]{0}', space=sflag, size = 0x4, scoped, tag = 'scoped memory for bert_for_latent_connector_forward.1']
              %p1813 = scmp.lt.u32.totalorder 64, 8
              %p1814 = pneg %p1813
              // Predicated region
              $region71: #{bert_for_latent_connector_forward.1} parent=70 // pred_check
                _
              $region72: #{bert_for_latent_connector_forward.1} parent=70 // pred_check_branch
                %1816 = sbr.rel (%p1813) target = $region74
              $region73: #{bert_for_latent_connector_forward.1} parent=70 // pred_region
                %s1831 = sand.u32 64, 7
                %p1832 = scmp.eq.s32.totalorder %s1831, 0
                // Predicated region
                $region86: #{bert_for_latent_connector_forward.1} parent=73 // pred_check
                  %p1833 = pneg %p1832
                $region87: #{bert_for_latent_connector_forward.1} parent=73 // pred_check_branch
                  %1835 = sbr.rel (%p1833) target = $region89
                $region88: #{bert_for_latent_connector_forward.1} parent=73 // pred_region
                  loop: start=0, step=1, limit=1
                  $region90: #{bert_for_latent_connector_forward.1} parent=88 // loop_pre_header
                    _
                  $region91: #{bert_for_latent_connector_forward.1} parent=88 // loop_header
                    %s1837 = sphi 0, %s1841
                    %p1838 = scmp.ge.s32.totalorder %s1837, 1
                    %s1842 = sphi %s8, %s8
                    %s1843 = sphi [#allocation11], [#allocation11]
                  $region92: #{bert_for_latent_connector_forward.1} parent=88 // loop_header_branch
                    %1840 = sbr.rel (%p1838) target = $region96
                  $region93: #{bert_for_latent_connector_forward.1} parent=88 // loop_body
                    %v1844 = vld [vmem:[%s1842] sm:$0xff]
                    %1845 = vst [vmem:[%s1843] sm:$0xff] %v1844
                    %v1846 = vld [vmem:[%s1842 + $0x8] sm:$0xff]
                    %1847 = vst [vmem:[%s1843 + $0x8] sm:$0xff] %v1846
                    %v1848 = vld [vmem:[%s1842 + $0x10] sm:$0xff]
                    %1849 = vst [vmem:[%s1843 + $0x10] sm:$0xff] %v1848
                    %v1850 = vld [vmem:[%s1842 + $0x18] sm:$0xff]
                    %1851 = vst [vmem:[%s1843 + $0x18] sm:$0xff] %v1850
                    %v1852 = vld [vmem:[%s1842 + $0x20] sm:$0xff]
                    %1853 = vst [vmem:[%s1843 + $0x20] sm:$0xff] %v1852
                    %v1854 = vld [vmem:[%s1842 + $0x28] sm:$0xff]
                    %1855 = vst [vmem:[%s1843 + $0x28] sm:$0xff] %v1854
                    %v1856 = vld [vmem:[%s1842 + $0x30] sm:$0xff]
                    %1857 = vst [vmem:[%s1843 + $0x30] sm:$0xff] %v1856
                    %v1858 = vld [vmem:[%s1842 + $0x38] sm:$0xff]
                    %1859 = vst [vmem:[%s1843 + $0x38] sm:$0xff] %v1858
                  $region94: #{bert_for_latent_connector_forward.1} parent=88 // loop_footer
                    %s1841 = sadd.s32 1, %s1837
                  $region95: #{bert_for_latent_connector_forward.1} parent=88 // loop_footer_branch
                    %1836 = sbr.rel target = $region91
                  $region96: #{bert_for_latent_connector_forward.1} parent=88 // loop_exit
                    _
                $region89: #{bert_for_latent_connector_forward.1} parent=73 // pred_fallthru
                  _
                %p1860 = pneg %p1832
                // Predicated region
                $region97: #{bert_for_latent_connector_forward.1} parent=73 // pred_check
                  _
                $region98: #{bert_for_latent_connector_forward.1} parent=73 // pred_check_branch
                  %1862 = sbr.rel (%p1832) target = $region100
                $region99: #{bert_for_latent_connector_forward.1} parent=73 // pred_region
                  %s1863 = sand.u32 64, 7
                $region100: #{bert_for_latent_connector_forward.1} parent=73 // pred_fallthru
                  _
              $region74: #{bert_for_latent_connector_forward.1} parent=70 // pred_fallthru
                _
              // Predicated region
              $region75: #{bert_for_latent_connector_forward.1} parent=70 // pred_check
                %p1817 = pneg %p1813
              $region76: #{bert_for_latent_connector_forward.1} parent=70 // pred_check_branch
                %1819 = sbr.rel (%p1817) target = $region78
              $region77: #{bert_for_latent_connector_forward.1} parent=70 // pred_region
                %s1820 = sshllo.u32 0, 64
                loop: start=0, step=1, limit=1
                $region79: #{bert_for_latent_connector_forward.1} parent=77 // loop_pre_header
                  _
                $region80: #{bert_for_latent_connector_forward.1} parent=77 // loop_header
                  %s1822 = sphi 0, %s1826
                  %p1823 = scmp.ge.s32.totalorder %s1822, 1
                  %s1827 = sphi %s8, %s8
                  %s1828 = sphi [#allocation11], [#allocation11]
                $region81: #{bert_for_latent_connector_forward.1} parent=77 // loop_header_branch
                  %1825 = sbr.rel (%p1823) target = $region85
                $region82: #{bert_for_latent_connector_forward.1} parent=77 // loop_body
                  %v1829 = vld [vmem:[%s1827] sm:%s1820]
                  %1830 = vst [vmem:[%s1828] sm:%s1820] %v1829
                $region83: #{bert_for_latent_connector_forward.1} parent=77 // loop_footer
                  %s1826 = sadd.s32 1, %s1822
                $region84: #{bert_for_latent_connector_forward.1} parent=77 // loop_footer_branch
                  %1821 = sbr.rel target = $region80
                $region85: #{bert_for_latent_connector_forward.1} parent=77 // loop_exit
                  _
              $region78: #{bert_for_latent_connector_forward.1} parent=70 // pred_fallthru
                _
              // Predicated region
              $region101: #{bert_for_latent_connector_forward.1} parent=70 // pred_check
                _
              $region102: #{bert_for_latent_connector_forward.1} parent=70 // pred_check_branch
                %1866 = sbr.rel (0) target = $region104
              $region103: #{bert_for_latent_connector_forward.1} parent=70 // pred_region
                %1867 = vsyncadd [#allocation12], 1024
              $region104: #{bert_for_latent_connector_forward.1} parent=70 // pred_fallthru
                _
              %s1868 = smul.u32 4, 16
              %s1869 = smul.u32 %s1868, 1
              %s1870 = sshll.u32 %s1869, 4
              %1871 = dma.done [#allocation12], %s1870
            $region105: #{bert_for_latent_connector_forward.1} parent=69
              #allocation14 [shape = 's32[1]{0}', space=sflag, size = 0x4, scoped, tag = 'scoped memory for bert_for_latent_connector_forward.1']
              %s1872 = scalar_lea.vmem [#allocation11], 64
              // Predicated region
              $region106: #{bert_for_latent_connector_forward.1} parent=105 // pred_check
                _
              $region107: #{bert_for_latent_connector_forward.1} parent=105 // pred_check_branch
                %1874 = sbr.rel target = $region109
              $region108: #{bert_for_latent_connector_forward.1} parent=105 // pred_region
                %1875 = sst [smem:[#allocation17]] [#allocation16]
                %1876 = sst [smem:[#allocation18]] [#allocation15]
              $region109: #{bert_for_latent_connector_forward.1} parent=105 // pred_fallthru
                _
              %1878 = shalt.err (0)
              %s1880 = sshll.u32 %s1872, 4
              %s1881 = int_to_ptr.vmem [resolvable:$true] %s1880
              %1883 = dma.hbm_to_vmem [thread:$0]  %s9, 1024, %s1881, [#allocation14]
              %s1884 = smul.u32 4, 16
              %s1885 = smul.u32 %s1884, 1
              %s1886 = sshll.u32 %s1885, 4
              %1887 = dma.done [#allocation14], %s1886
            %v1888 = vld [vmem:[#allocation11] sm:$0xff]
            %v1889 = vld [vmem:[#allocation11 + $0x8] sm:$0xff]
            %v1890 = vld [vmem:[#allocation11 + $0x10] sm:$0xff]
            %v1891 = vld [vmem:[#allocation11 + $0x18] sm:$0xff]
            %v1892 = vld [vmem:[#allocation11 + $0x20] sm:$0xff]
            %v1893 = vld [vmem:[#allocation11 + $0x28] sm:$0xff]
            %v1894 = vld [vmem:[#allocation11 + $0x30] sm:$0xff]
            %v1895 = vld [vmem:[#allocation11 + $0x38] sm:$0xff]
            %s1896 = scalar_lea.vmem [#allocation11], 64
            %v1897 = vld [vmem:[%s1896] sm:$0xff]
            %v1898 = vld [vmem:[%s1896 + $0x8] sm:$0xff]
            %v1899 = vld [vmem:[%s1896 + $0x10] sm:$0xff]
            %v1900 = vld [vmem:[%s1896 + $0x18] sm:$0xff]
            %v1901 = vld [vmem:[%s1896 + $0x20] sm:$0xff]
            %v1902 = vld [vmem:[%s1896 + $0x28] sm:$0xff]
            %v1903 = vld [vmem:[%s1896 + $0x30] sm:$0xff]
            %v1904 = vld [vmem:[%s1896 + $0x38] sm:$0xff]
            %v1906 = vrot.slane %v1805, 7
            %vm1908 = vcmask 1040384
            %v1909 = vsel %vm1908, %v1804, %v1906
            %v1910 = vpack.c.bf16 %v1909, %v1909
            %v1911 = vlaneseq
            %v1912 = vshrl.u32 %v1911, 7
            %v1913 = vsub.s32 0, %v1912
            %v1914 = vrot.slane %v443, %v1913
            %1915 = vmatprep.subr.bf16.mxu0 0
            %1916 = vmatpush1.bf16.msra.mxu0 %v1888
            %1917 = vmatprep.subr.bf16.mxu0 0
            %1918 = vmatpush1.bf16.msra.mxu0 %v1889
            %1919 = vmatprep.subr.bf16.mxu0 0
            %1920 = vmatpush1.bf16.msra.mxu0 %v1890
            %1921 = vmatprep.subr.bf16.mxu0 0
            %1922 = vmatpush1.bf16.msra.mxu0 %v1891
            %1923 = vmatprep.subr.bf16.mxu0 0
            %1924 = vmatpush1.bf16.msra.mxu0 %v1892
            %1925 = vmatprep.subr.bf16.mxu0 0
            %1926 = vmatpush1.bf16.msra.mxu0 %v1893
            %1927 = vmatprep.subr.bf16.mxu0 0
            %1928 = vmatpush1.bf16.msra.mxu0 %v1894
            %1929 = vmatprep.subr.bf16.mxu0 0
            %1930 = vmatpush1.bf16.msra.mxu0 %v1895
            %1931 = vmatprep.subr.bf16.mxu0 0
            %1932 = vmatpush1.bf16.msra.mxu0 0
            %1933 = vmatprep.subr.bf16.mxu0 0
            %1934 = vmatpush1.bf16.msra.mxu0 0
            %1935 = vmatprep.subr.bf16.mxu0 0
            %1936 = vmatpush1.bf16.msra.mxu0 0
            %1937 = vmatprep.subr.bf16.mxu0 0
            %1938 = vmatpush1.bf16.msra.mxu0 0
            %1939 = vmatprep.subr.bf16.mxu0 0
            %1940 = vmatpush1.bf16.msra.mxu0 0
            %1941 = vmatprep.subr.bf16.mxu0 0
            %1942 = vmatpush1.bf16.msra.mxu0 0
            %1943 = vmatprep.subr.bf16.mxu0 0
            %1944 = vmatpush1.bf16.msra.mxu0 0
            %1945 = vmatprep.subr.bf16.mxu0 0
            %1946 = vmatpush1.bf16.msra.mxu0 0
            %1947 = vmatprep.mubr.bf16.mxu0 0
            %1948 = vmatmul.mubr.bf16.gmra.mrb[0].mxu0 %v1910
            %v1949 = vpop.f32.mrb[0].mxu0
            %v1950 = vadd.f32 %v1914, %v1949
            %v1951 = vpop.f32.mrb[0].mxu0
            %v1952 = vpop.f32.mrb[0].mxu0
            %v1953 = vpop.f32.mrb[0].mxu0
            %1954 = vdwg.mxu0
            %v1955 = vtanh.pop %v1950
            %vm1956 = vcmask 1041408
            %v1957 = vsel %vm1956, %v1955, 0.0
            %1958 = vadd.xlane.f32.xlu0 %v1957
            %v1959 = vpop.xlane.xlu0 %1958
            %v1960 = vmul.f32 %v1959, 0.03125
            %v1961 = vsub.f32 %v1955, %v1960
            %v1962 = vmul.f32 %v1961, %v442
            %v1963 = vmul.f32 %v1962, %v1962
            %v1964 = vsel %vm1956, %v1963, 0.0
            %1965 = vadd.xlane.f32.xlu0 %v1964
            %v1966 = vpop.xlane.xlu0 %1965
            %v1967 = vmul.f32 %v1966, 0.03125
            %v1968 = vadd.f32 %v1967, 1e-05
            %v1969 = vrsqrt.pop %v1968
            %v1970 = vmul.f32 %v1962, %v1969
            %v1971 = vlaneseq
            %v1972 = vshrl.u32 %v1971, 7
            %v1973 = vsub.s32 1, %v1972
            %v1974 = vrot.slane %v443, %v1973
            %v1975 = vmul.f32 %v1970, %v1974
            %v1976 = vlaneseq
            %v1977 = vshrl.u32 %v1976, 7
            %v1978 = vsub.s32 2, %v1977
            %v1979 = vrot.slane %v443, %v1978
            %v1980 = vadd.f32 %v1975, %v1979
            %1981 = vst [vmem:[#allocation8] sm:$0x3] %v1980
            %v1982 = vpack.c.bf16 %v1980, %v1980
            %1983 = vmatprep.subr.bf16.mxu0 0
            %1984 = vmatpush1.bf16.msra.mxu0 %v1897
            %1985 = vmatprep.subr.bf16.mxu0 0
            %1986 = vmatpush1.bf16.msra.mxu0 %v1898
            %1987 = vmatprep.subr.bf16.mxu0 0
            %1988 = vmatpush1.bf16.msra.mxu0 %v1899
            %1989 = vmatprep.subr.bf16.mxu0 0
            %1990 = vmatpush1.bf16.msra.mxu0 %v1900
            %1991 = vmatprep.subr.bf16.mxu0 0
            %1992 = vmatpush1.bf16.msra.mxu0 %v1901
            %1993 = vmatprep.subr.bf16.mxu0 0
            %1994 = vmatpush1.bf16.msra.mxu0 %v1902
            %1995 = vmatprep.subr.bf16.mxu0 0
            %1996 = vmatpush1.bf16.msra.mxu0 %v1903
            %1997 = vmatprep.subr.bf16.mxu0 0
            %1998 = vmatpush1.bf16.msra.mxu0 %v1904
            %1999 = vmatprep.subr.bf16.mxu0 0
            %2000 = vmatpush1.bf16.msra.mxu0 0
            %2001 = vmatprep.subr.bf16.mxu0 0
            %2002 = vmatpush1.bf16.msra.mxu0 0
            %2003 = vmatprep.subr.bf16.mxu0 0
            %2004 = vmatpush1.bf16.msra.mxu0 0
            %2005 = vmatprep.subr.bf16.mxu0 0
            %2006 = vmatpush1.bf16.msra.mxu0 0
            %2007 = vmatprep.subr.bf16.mxu0 0
            %2008 = vmatpush1.bf16.msra.mxu0 0
            %2009 = vmatprep.subr.bf16.mxu0 0
            %2010 = vmatpush1.bf16.msra.mxu0 0
            %2011 = vmatprep.subr.bf16.mxu0 0
            %2012 = vmatpush1.bf16.msra.mxu0 0
            %2013 = vmatprep.subr.bf16.mxu0 0
            %2014 = vmatpush1.bf16.msra.mxu0 0
            %2015 = vmatprep.mubr.bf16.mxu0 0
            %2016 = vmatmul.mubr.bf16.gmra.mrb[0].mxu0 %v1982
            %v2017 = vpop.f32.mrb[0].mxu0
            %v2018 = vadd.f32 0.0, %v2017
            %v2019 = vpop.f32.mrb[0].mxu0
            %v2020 = vpop.f32.mrb[0].mxu0
            %v2021 = vpop.f32.mrb[0].mxu0
            %2022 = vdwg.mxu0
            %2023 = vst [vmem:[#allocation9] sm:$0x3] %v2018
        $region68: #{bert_for_latent_connector_forward.1} parent=51 // pred_fallthru
          _
        // Predicated region
        $region110: #{bert_for_latent_connector_forward.1} parent=51 // pred_check
          %p2024 = pneg %p237
        $region111: #{bert_for_latent_connector_forward.1} parent=51 // pred_check_branch
          %2026 = sbr.rel (%p2024) target = $region113
        $region112: #{bert_for_latent_connector_forward.1} parent=51 // pred_region
          %s2028 = ssub.s32 32, 32
          %2029 = vsyncadd [#allocation5], %s2028
          %s2031 = sshll.u32 [#allocation8], 4
          %s2032 = int_to_ptr.vmem [resolvable:$true] %s2031
          %2034 = dma.vmem_to_hbm [thread:$0]  %s2032, 32, %s10, [#allocation5]
        $region113: #{bert_for_latent_connector_forward.1} parent=51 // pred_fallthru
          _
        // Predicated region
        $region114: #{bert_for_latent_connector_forward.1} parent=51 // pred_check
          %p2035 = pneg %p258
        $region115: #{bert_for_latent_connector_forward.1} parent=51 // pred_check_branch
          %2037 = sbr.rel (%p2035) target = $region117
        $region116: #{bert_for_latent_connector_forward.1} parent=51 // pred_region
          %s2039 = ssub.s32 32, 32
          %2040 = vsyncadd [#allocation10], %s2039
          %s2042 = sshll.u32 [#allocation9], 4
          %s2043 = int_to_ptr.vmem [resolvable:$true] %s2042
          %2045 = dma.vmem_to_hbm [thread:$0]  %s2043, 32, %s11, [#allocation10]
        $region117: #{bert_for_latent_connector_forward.1} parent=51 // pred_fallthru
          _
        // Predicated region
        $region118: #{bert_for_latent_connector_forward.1} parent=51 // pred_check
          %p2046 = pneg %p237
        $region119: #{bert_for_latent_connector_forward.1} parent=51 // pred_check_branch
          %2048 = sbr.rel (%p2046) target = $region121
        $region120: #{bert_for_latent_connector_forward.1} parent=51 // pred_region
          %2049 = dma.done [#allocation5], 32
        $region121: #{bert_for_latent_connector_forward.1} parent=51 // pred_fallthru
          _
        // Predicated region
        $region122: #{bert_for_latent_connector_forward.1} parent=51 // pred_check
          %p2050 = pneg %p258
        $region123: #{bert_for_latent_connector_forward.1} parent=51 // pred_check_branch
          %2052 = sbr.rel (%p2050) target = $region125
        $region124: #{bert_for_latent_connector_forward.1} parent=51 // pred_region
          %2053 = dma.done [#allocation10], 32
        $region125: #{bert_for_latent_connector_forward.1} parent=51 // pred_fallthru
          _
      $region52: #{bert_for_latent_connector_forward.1} parent=5 // pred_fallthru
        _
      %p2054 = scmp.le.s32.totalorder 2, %s26
      // Predicated region
      $region126: #{bert_for_latent_connector_forward.1} parent=5 // pred_check
        %p2055 = pneg %p2054
      $region127: #{bert_for_latent_connector_forward.1} parent=5 // pred_check_branch
        %2057 = sbr.rel (%p2055) target = $region129
      $region128: #{bert_for_latent_connector_forward.1} parent=5 // pred_region
        %s2058 = ssub.s32 %s26, 2
      $region129: #{bert_for_latent_connector_forward.1} parent=5 // pred_fallthru
        _
    $region6: #{bert_for_latent_connector_forward.1} parent=1 // loop_footer
      %s30 = sadd.s32 1, %s26
    $region7: #{bert_for_latent_connector_forward.1} parent=1 // loop_footer_branch
      %25 = sbr.rel target = $region3
    $region8: #{bert_for_latent_connector_forward.1} parent=1 // loop_exit
      _
    %2059 = vsyncpa [#allocation4], 1
    %s2060 = scalar_lea.sflag [#allocation4], 1
    %2061 = vsyncpa %s2060, 1
    %2062 = vsyncpa [#allocation7], 1
    %s2063 = scalar_lea.sflag [#allocation7], 1
    %2064 = vsyncpa %s2063, 1
    %2065 = vsyncpa [#allocation5], 1
    %s2066 = scalar_lea.sflag [#allocation5], 1
    %2067 = vsyncpa %s2066, 1
    %2068 = vsyncpa [#allocation10], 1

</llo_original>
